<compile_context>
chip_gen: v7x
topology: tpu7x:2x2x1
jax: 0.10.0
libtpu: 0.0.40
codegen_flags: <defaults>
</compile_context>

<pallas_src>
import jax
import jax.numpy as jnp
from jax import lax
from jax.experimental import pallas as pl
from jax.experimental.pallas import tpu as pltpu

_LANE = 128   # half-width of a packed conv output (one lane tile per pool-column parity)
_BT = 128     # max images per grid step (batch tile); multiple of 8


# -----------------------------------------------------------------------------
# Weight packing (done once, outside the kernel)
# -----------------------------------------------------------------------------
def _band_weight(w_oihw, in_w, lane_half):
    """Banded per-row-tap matrices folding the width conv + pool-column split.

    Returns (KH, in_w*Cin, 2*lane_half) where
      input lane  = w*Cin + c
      output lane = s*lane_half + q*Cout + co   with conv output column ox = 2q+s
    and entry = w[co, c, dy, w-ox] when 0 <= w-ox < KW, else 0.
    """
    cout, cin, kh, kw = w_oihw.shape
    ow = in_w - kw + 1
    pw = ow // 2
    assert pw * cout <= lane_half
    # shift[dx, w, ox] = 1 iff w == ox + dx
    shift = (jnp.arange(in_w)[None, :, None]
             == jnp.arange(ow)[None, None, :] + jnp.arange(kw)[:, None, None]
             ).astype(w_oihw.dtype)                                   # (kw, in_w, ow)
    band = jnp.einsum('xwa,kcyx->ywcak', shift, w_oihw)               # (kh,in_w,cin,ow,cout)
    band = band.reshape(kh, in_w * cin, pw, 2, cout)
    band = band.transpose(0, 1, 3, 2, 4).reshape(kh, in_w * cin, 2, pw * cout)
    band = jnp.pad(band, ((0, 0), (0, 0), (0, 0), (0, lane_half - pw * cout)))
    return band.reshape(kh, in_w * cin, 2 * lane_half)


def pack_params(params):
    """Pack PyTorch-layout params into MXU/lane-friendly bf16 constant operands."""
    w1, b1, w2, b2, fw1, fb1, fw2, fb2 = params
    cout1, cin, kh, kw = w1.shape
    cout2 = w2.shape[0]
    nh, nc = fw1.shape[0], fw2.shape[0]
    h_in = 28
    pw1 = (h_in - kw + 1) // 2        # 12
    pw2 = (pw1 - kw + 1) // 2         # 4

    # conv1: fuse the 5 row taps along K -> (5*28*cin, 256)
    m1 = _band_weight(w1, h_in, _LANE).reshape(kh * h_in * cin, 2 * _LANE)
    # conv2: per-tap K padded 120 -> 128 to match y1's 128-lane layout, fused -> (640, 256)
    m2 = _band_weight(w2, pw1, _LANE)                                  # (5, 120, 256)
    m2 = jnp.pad(m2, ((0, 0), (0, _LANE - pw1 * cout1), (0, 0)))       # (5, 128, 256)
    m2 = m2.reshape(kh * _LANE, 2 * _LANE)

    b1v = jnp.pad(jnp.tile(b1, pw1), (0, _LANE - pw1 * cout1)).reshape(1, _LANE)
    b2v = jnp.pad(jnp.tile(b2, pw2), (0, _LANE - pw2 * cout2)).reshape(1, _LANE)

    # fc1: fold the kernel's flatten order (h, then w*Cout+co lanes) into the
    # weight permutation (PyTorch view(-1, 320) is NCHW order), pad N 50 -> 128.
    wp1 = fw1.reshape(nh, cout2, pw2, pw2).transpose(2, 3, 1, 0)       # (h, w, c, j)
    wp1 = wp1.reshape(pw2, pw2 * cout2, nh)
    wp1 = jnp.pad(wp1, ((0, 0), (0, _LANE - pw2 * cout2), (0, 0)))
    wp1 = wp1.reshape(pw2 * _LANE, nh)                                 # (512, nh)
    wp1 = jnp.pad(wp1, ((0, 0), (0, _LANE - nh)))                      # (512, 128)
    cf1 = jnp.pad(fb1, (0, _LANE - nh)).reshape(1, _LANE)
    # fc2: pad K 50 -> 128 and N nc -> 128 (lane-dense output slab)
    wp2 = jnp.pad(fw2.T, ((0, _LANE - nh), (0, _LANE - nc)))           # (128, 128)
    cf2 = jnp.pad(fb2, (0, _LANE - nc)).reshape(1, _LANE)

    bf = lambda a: a.astype(jnp.bfloat16)
    f32 = lambda a: a.astype(jnp.float32)
    return (bf(m1), f32(b1v), bf(m2), f32(b2v), bf(wp1), f32(cf1), bf(wp2), f32(cf2))


# -----------------------------------------------------------------------------
# Fused forward kernel
# -----------------------------------------------------------------------------
def _make_kernel(bt):
    P1, P2, KH = 12, 4, 5   # pooled sizes after conv1 / conv2, conv kernel height

    def kernel(x_ref, m1_ref, b1_ref, m2_ref, b2_ref,
               wf1_ref, cf1_ref, wf2_ref, cf2_ref, o_ref):
        # ---- conv1 (5x5, cin->10): one fused K=140 matmul, both pool-row
        #      parities stacked along M; + 2x2 max-pool + bias + ReLU ---------
        a1 = jnp.dot(x_ref[0, :, :], m1_ref[...],
                     preferred_element_type=jnp.float32)            # (24*bt, 256)
        h1 = jnp.maximum(a1[:P1 * bt, :], a1[P1 * bt:, :])          # pool rows
        y1 = jnp.maximum(jnp.maximum(h1[:, :_LANE], h1[:, _LANE:])  # pool cols
                         + b1_ref[...], 0.0)                        # (12*bt, 128) f32

        # row-parity split of conv1 output for conv2's pooled-row taps
        y1_e = jnp.concatenate([y1[(2 * k) * bt:(2 * k + 1) * bt, :]
                                for k in range(P1 // 2)], axis=0)   # (6*bt, 128)
        y1_o = jnp.concatenate([y1[(2 * k + 1) * bt:(2 * k + 2) * bt, :]
                                for k in range(P1 // 2)], axis=0)

        def conv2_lhs(sr):
            blocks = []
            for dy in range(KH):
                src = y1_e if (sr + dy) % 2 == 0 else y1_o
                off = (sr + dy) // 2
                blocks.append(src[off * bt:(off + P2) * bt, :])
            return jnp.concatenate(blocks, axis=1)                  # (4*bt, 640)

        # ---- conv2 (5x5, 10->20): one fused K=640 matmul + pool + ReLU ------
        # TODO(synk): Dropout2d / dropout use inference (identity) behaviour.
        lhs2 = jnp.concatenate([conv2_lhs(0), conv2_lhs(1)], axis=0)  # (8*bt, 640)
        a2 = jnp.dot(lhs2.astype(jnp.bfloat16), m2_ref[...],
                     preferred_element_type=jnp.float32)              # (8*bt, 256)
        h2 = jnp.maximum(a2[:P2 * bt, :], a2[P2 * bt:, :])
        z2 = jnp.maximum(jnp.maximum(h2[:, :_LANE], h2[:, _LANE:])
                         + b2_ref[...], 0.0)                          # (4*bt, 128) f32

        # ---- flatten (order folded into wf1) + fc1 + ReLU + fc2 -------------
        flat = jnp.concatenate([z2[p * bt:(p + 1) * bt, :] for p in range(P2)],
                               axis=1)                                # (bt, 512)
        hid = jnp.maximum(jnp.dot(flat.astype(jnp.bfloat16), wf1_ref[...],
                                  preferred_element_type=jnp.float32)
                          + cf1_ref[...], 0.0)                        # (bt, 128)
        o_ref[...] = (jnp.dot(hid.astype(jnp.bfloat16), wf2_ref[...],
                              preferred_element_type=jnp.float32)
                      + cf2_ref[...]).astype(o_ref.dtype)             # (bt, 128)
    return kernel


# -----------------------------------------------------------------------------
# Host-side input prep: pre-stack the 5 conv1 row-tap windows (K = 140*cin)
# -----------------------------------------------------------------------------
def _prep_input(x_nchw, bt):
    b, cin, h, w = x_nchw.shape
    assert h == 28 and w == 28, "CNNMnist geometry requires 28x28 inputs"
    KH = 5
    OH = h - KH + 1                 # 24 conv1 output rows
    P1 = OH // 2                    # 12 pooled rows
    K1 = KH * w * cin               # 140*cin fused contraction depth
    bp = ((b + bt - 1) // bt) * bt
    if bp != b:
        x_nchw = jnp.pad(x_nchw, ((0, bp - b), (0, 0), (0, 0), (0, 0)))
    x = jnp.transpose(x_nchw, (0, 2, 3, 1)).reshape(bp, h, w * cin)   # (Bp, 28, 28c)
    idx = jnp.arange(OH)[:, None] + jnp.arange(KH)[None, :]           # (24, 5)
    win = x[:, idx, :]                                                # (Bp, 24, 5, 28c)
    win = win.reshape(bp, P1, 2, K1)                                  # oy = 2p + sr
    win = win.reshape(bp // bt, bt, P1, 2, K1).transpose(0, 3, 2, 1, 4)
    win = win.reshape(bp // bt, 2 * P1 * bt, K1)                      # row = sr*P1*bt + p*bt + b
    return win.astype(jnp.bfloat16), bp


def _choose_bt(batch):
    """Big tiles for throughput; keep >= 2 grid steps when the batch allows
    (v7x megacore), always a multiple of 8."""
    if batch >= 2 * _BT:
        return _BT
    bt = max(8, -(-batch // 2))
    return min(_BT, ((bt + 7) // 8) * 8)


def cnn_mnist_forward(x_nchw, packed, num_classes=10, bt=None):
    m1, b1v, m2, b2v, wp1, cf1, wp2, cf2 = packed
    b = x_nchw.shape[0]
    if bt is None:
        bt = _choose_bt(b)

    xin, bp = _prep_input(x_nchw, bt)
    n_tiles = bp // bt
    K1 = xin.shape[-1]

    out = pl.pallas_call(
        _make_kernel(bt),
        out_shape=jax.ShapeDtypeStruct((bp, _LANE), jnp.float32),
        grid=(n_tiles,),
        in_specs=[
            pl.BlockSpec((1, 24 * bt, K1), lambda i: (i, 0, 0)),
            pl.BlockSpec(m1.shape, lambda i: (0, 0)),
            pl.BlockSpec(b1v.shape, lambda i: (0, 0)),
            pl.BlockSpec(m2.shape, lambda i: (0, 0)),
            pl.BlockSpec(b2v.shape, lambda i: (0, 0)),
            pl.BlockSpec(wp1.shape, lambda i: (0, 0)),
            pl.BlockSpec(cf1.shape, lambda i: (0, 0)),
            pl.BlockSpec(wp2.shape, lambda i: (0, 0)),
            pl.BlockSpec(cf2.shape, lambda i: (0, 0)),
        ],
        out_specs=pl.BlockSpec((bt, _LANE), lambda i: (i, 0)),
        compiler_params=pltpu.CompilerParams(
            dimension_semantics=("parallel",),
            vmem_limit_bytes=32 * 1024 * 1024),
    )(xin, m1, b1v, m2, b2v, wp1, cf1, wp2, cf2)
    return out[:b, :num_classes]


# -----------------------------------------------------------------------------
# Pure-JAX reference (matches the PyTorch module in eval mode, f32)
# -----------------------------------------------------------------------------
def reference_forward(x_nchw, params):
    w1, b1, w2, b2, fw1, fb1, fw2, fb2 = params

    def maxpool2(y):
        b, c, h, w = y.shape
        return y.reshape(b, c, h // 2, 2, w // 2, 2).max(axis=(3, 5))

    dn = ("NCHW", "OIHW", "NCHW")
    y = lax.conv_general_dilated(x_nchw, w1, (1, 1), "VALID", dimension_numbers=dn)
    y = jnp.maximum(maxpool2(y + b1[None, :, None, None]), 0.0)
    y = lax.conv_general_dilated(y, w2, (1, 1), "VALID", dimension_numbers=dn)
    y = jnp.maximum(maxpool2(y + b2[None, :, None, None]), 0.0)
    y = y.reshape(y.shape[0], -1)
    y = jnp.maximum(y @ fw1.T + fb1, 0.0)
    return y @ fw2.T + fb2


# -----------------------------------------------------------------------------
# Main
# -----------------------------------------------------------------------------
if __name__ == "__main__":
    num_channels, num_classes = 1, 10
    batch = 2

    key = jax.random.PRNGKey(0)
    ks = jax.random.split(key, 9)
    scale = 0.05
    params = (
        scale * jax.random.normal(ks[0], (10, num_channels, 5, 5), jnp.float32),  # conv1.weight
        scale * jax.random.normal(ks[1], (10,), jnp.float32),                     # conv1.bias
        scale * jax.random.normal(ks[2], (20, 10, 5, 5), jnp.float32),            # conv2.weight
        scale * jax.random.normal(ks[3], (20,), jnp.float32),                     # conv2.bias
        scale * jax.random.normal(ks[4], (50, 320), jnp.float32),                 # fc1.weight
        scale * jax.random.normal(ks[5], (50,), jnp.float32),                     # fc1.bias
        scale * jax.random.normal(ks[6], (num_classes, 50), jnp.float32),         # fc2.weight
        scale * jax.random.normal(ks[7], (num_classes,), jnp.float32),            # fc2.bias
    )

    # MNIST geometry: 28x28 so that 20*4*4 == 320 for fc1.
    x = jax.random.normal(ks[8], (batch, num_channels, 28, 28), jnp.float32)

    packed = jax.tree_util.tree_map(jax.block_until_ready, pack_params(params))
    forward = jax.jit(cnn_mnist_forward)

    out = jax.block_until_ready(forward(x, packed))
    ref = jax.block_until_ready(reference_forward(x, params))

    assert out.shape == (batch, num_classes)
    assert jnp.allclose(out, ref, rtol=2e-2, atol=2e-2), (
        f"mismatch: max abs diff {float(jnp.max(jnp.abs(out - ref)))}"
    )

    print("KERNEL_OK")
</pallas_src>

<mosaic_0001>
module attributes {stable_mosaic.version = 11 : i64} {
  func.func @kernel(%arg0: i32, %arg1: memref<1x192x140xbf16, #tpu.memory_space<vmem>>, %arg2: memref<140x256xbf16, #tpu.memory_space<vmem>>, %arg3: memref<1x128xf32, #tpu.memory_space<vmem>>, %arg4: memref<640x256xbf16, #tpu.memory_space<vmem>>, %arg5: memref<1x128xf32, #tpu.memory_space<vmem>>, %arg6: memref<512x128xbf16, #tpu.memory_space<vmem>>, %arg7: memref<1x128xf32, #tpu.memory_space<vmem>>, %arg8: memref<128x128xbf16, #tpu.memory_space<vmem>>, %arg9: memref<1x128xf32, #tpu.memory_space<vmem>>, %arg10: memref<8x128xf32, #tpu.memory_space<vmem>>) attributes {dimension_semantics = [#tpu.dimension_semantics<parallel>], iteration_bounds = array<i64: 1>, scalar_prefetch = 0 : i64, scratch_operands = 0 : i64, tpu.core_type = #tpu.core_type<tc>, window_params = [{transform_indices = @transform_0, window_bounds = array<i64: 1, 192, 140>}, {pipeline_mode = #tpu.pipeline_mode<synchronous>, transform_indices = @transform_1, window_bounds = array<i64: 140, 256>}, {pipeline_mode = #tpu.pipeline_mode<synchronous>, transform_indices = @transform_2, window_bounds = array<i64: 1, 128>}, {pipeline_mode = #tpu.pipeline_mode<synchronous>, transform_indices = @transform_3, window_bounds = array<i64: 640, 256>}, {pipeline_mode = #tpu.pipeline_mode<synchronous>, transform_indices = @transform_4, window_bounds = array<i64: 1, 128>}, {pipeline_mode = #tpu.pipeline_mode<synchronous>, transform_indices = @transform_5, window_bounds = array<i64: 512, 128>}, {pipeline_mode = #tpu.pipeline_mode<synchronous>, transform_indices = @transform_6, window_bounds = array<i64: 1, 128>}, {pipeline_mode = #tpu.pipeline_mode<synchronous>, transform_indices = @transform_7, window_bounds = array<i64: 128, 128>}, {pipeline_mode = #tpu.pipeline_mode<synchronous>, transform_indices = @transform_8, window_bounds = array<i64: 1, 128>}, {transform_indices = @transform_9, window_bounds = array<i64: 8, 128>}]} {
    %c0 = arith.constant 0 : index
    %c0_0 = arith.constant 0 : index
    %c0_1 = arith.constant 0 : index
    %0 = vector.load %arg1[%c0, %c0_0, %c0_1] : memref<1x192x140xbf16, #tpu.memory_space<vmem>>, vector<1x192x140xbf16>
    %1 = vector.shape_cast %0 : vector<1x192x140xbf16> to vector<192x140xbf16>
    %c0_2 = arith.constant 0 : index
    %c0_3 = arith.constant 0 : index
    %2 = vector.load %arg2[%c0_2, %c0_3] : memref<140x256xbf16, #tpu.memory_space<vmem>>, vector<140x256xbf16>
    %cst = arith.constant dense<0.000000e+00> : vector<192x256xf32>
    %3 = tpu.matmul %1, %2, %cst {dimension_numbers = #tpu.dot_dimension_numbers<[1], [0], [0], [1], [0, 0, 1, 1], [], []>} : vector<192x140xbf16>, vector<140x256xbf16>, vector<192x256xf32> -> vector<192x256xf32>
    %4 = vector.extract_strided_slice %3 {offsets = [0, 0], sizes = [96, 256], strides = [1, 1]} : vector<192x256xf32> to vector<96x256xf32>
    %5 = vector.extract_strided_slice %3 {offsets = [96, 0], sizes = [96, 256], strides = [1, 1]} : vector<192x256xf32> to vector<96x256xf32>
    %6 = arith.maximumf %4, %5 : vector<96x256xf32>
    %7 = vector.extract_strided_slice %6 {offsets = [0, 0], sizes = [96, 128], strides = [1, 1]} : vector<96x256xf32> to vector<96x128xf32>
    %8 = vector.extract_strided_slice %6 {offsets = [0, 128], sizes = [96, 128], strides = [1, 1]} : vector<96x256xf32> to vector<96x128xf32>
    %9 = arith.maximumf %7, %8 : vector<96x128xf32>
    %c0_4 = arith.constant 0 : index
    %c0_5 = arith.constant 0 : index
    %10 = vector.load %arg3[%c0_4, %c0_5] : memref<1x128xf32, #tpu.memory_space<vmem>>, vector<1x128xf32>
    %11 = vector.broadcast %10 : vector<1x128xf32> to vector<96x128xf32>
    %12 = arith.addf %9, %11 : vector<96x128xf32>
    %cst_6 = arith.constant 0.000000e+00 : f32
    %13 = vector.broadcast %cst_6 : f32 to vector<96x128xf32>
    %14 = arith.maximumf %12, %13 : vector<96x128xf32>
    %15 = vector.extract_strided_slice %14 {offsets = [0, 0], sizes = [8, 128], strides = [1, 1]} : vector<96x128xf32> to vector<8x128xf32>
    %16 = vector.extract_strided_slice %14 {offsets = [16, 0], sizes = [8, 128], strides = [1, 1]} : vector<96x128xf32> to vector<8x128xf32>
    %17 = vector.extract_strided_slice %14 {offsets = [32, 0], sizes = [8, 128], strides = [1, 1]} : vector<96x128xf32> to vector<8x128xf32>
    %18 = vector.extract_strided_slice %14 {offsets = [48, 0], sizes = [8, 128], strides = [1, 1]} : vector<96x128xf32> to vector<8x128xf32>
    %19 = vector.extract_strided_slice %14 {offsets = [64, 0], sizes = [8, 128], strides = [1, 1]} : vector<96x128xf32> to vector<8x128xf32>
    %20 = vector.extract_strided_slice %14 {offsets = [80, 0], sizes = [8, 128], strides = [1, 1]} : vector<96x128xf32> to vector<8x128xf32>
    %21 = tpu.concatenate %15, %16, %17, %18, %19, %20 in 0 : vector<8x128xf32>, vector<8x128xf32>, vector<8x128xf32>, vector<8x128xf32>, vector<8x128xf32>, vector<8x128xf32> -> vector<48x128xf32>
    %22 = vector.extract_strided_slice %14 {offsets = [8, 0], sizes = [8, 128], strides = [1, 1]} : vector<96x128xf32> to vector<8x128xf32>
    %23 = vector.extract_strided_slice %14 {offsets = [24, 0], sizes = [8, 128], strides = [1, 1]} : vector<96x128xf32> to vector<8x128xf32>
    %24 = vector.extract_strided_slice %14 {offsets = [40, 0], sizes = [8, 128], strides = [1, 1]} : vector<96x128xf32> to vector<8x128xf32>
    %25 = vector.extract_strided_slice %14 {offsets = [56, 0], sizes = [8, 128], strides = [1, 1]} : vector<96x128xf32> to vector<8x128xf32>
    %26 = vector.extract_strided_slice %14 {offsets = [72, 0], sizes = [8, 128], strides = [1, 1]} : vector<96x128xf32> to vector<8x128xf32>
    %27 = vector.extract_strided_slice %14 {offsets = [88, 0], sizes = [8, 128], strides = [1, 1]} : vector<96x128xf32> to vector<8x128xf32>
    %28 = tpu.concatenate %22, %23, %24, %25, %26, %27 in 0 : vector<8x128xf32>, vector<8x128xf32>, vector<8x128xf32>, vector<8x128xf32>, vector<8x128xf32>, vector<8x128xf32> -> vector<48x128xf32>
    %29 = vector.extract_strided_slice %21 {offsets = [0, 0], sizes = [32, 128], strides = [1, 1]} : vector<48x128xf32> to vector<32x128xf32>
    %30 = vector.extract_strided_slice %28 {offsets = [0, 0], sizes = [32, 128], strides = [1, 1]} : vector<48x128xf32> to vector<32x128xf32>
    %31 = vector.extract_strided_slice %21 {offsets = [8, 0], sizes = [32, 128], strides = [1, 1]} : vector<48x128xf32> to vector<32x128xf32>
    %32 = vector.extract_strided_slice %28 {offsets = [8, 0], sizes = [32, 128], strides = [1, 1]} : vector<48x128xf32> to vector<32x128xf32>
    %33 = vector.extract_strided_slice %21 {offsets = [16, 0], sizes = [32, 128], strides = [1, 1]} : vector<48x128xf32> to vector<32x128xf32>
    %34 = tpu.concatenate %29, %30, %31, %32, %33 in 1 : vector<32x128xf32>, vector<32x128xf32>, vector<32x128xf32>, vector<32x128xf32>, vector<32x128xf32> -> vector<32x640xf32>
    %35 = vector.extract_strided_slice %28 {offsets = [0, 0], sizes = [32, 128], strides = [1, 1]} : vector<48x128xf32> to vector<32x128xf32>
    %36 = vector.extract_strided_slice %21 {offsets = [8, 0], sizes = [32, 128], strides = [1, 1]} : vector<48x128xf32> to vector<32x128xf32>
    %37 = vector.extract_strided_slice %28 {offsets = [8, 0], sizes = [32, 128], strides = [1, 1]} : vector<48x128xf32> to vector<32x128xf32>
    %38 = vector.extract_strided_slice %21 {offsets = [16, 0], sizes = [32, 128], strides = [1, 1]} : vector<48x128xf32> to vector<32x128xf32>
    %39 = vector.extract_strided_slice %28 {offsets = [16, 0], sizes = [32, 128], strides = [1, 1]} : vector<48x128xf32> to vector<32x128xf32>
    %40 = tpu.concatenate %35, %36, %37, %38, %39 in 1 : vector<32x128xf32>, vector<32x128xf32>, vector<32x128xf32>, vector<32x128xf32>, vector<32x128xf32> -> vector<32x640xf32>
    %41 = tpu.concatenate %34, %40 in 0 : vector<32x640xf32>, vector<32x640xf32> -> vector<64x640xf32>
    %42 = arith.truncf %41 : vector<64x640xf32> to vector<64x640xbf16>
    %c0_7 = arith.constant 0 : index
    %c0_8 = arith.constant 0 : index
    %43 = vector.load %arg4[%c0_7, %c0_8] : memref<640x256xbf16, #tpu.memory_space<vmem>>, vector<640x256xbf16>
    %cst_9 = arith.constant dense<0.000000e+00> : vector<64x256xf32>
    %44 = tpu.matmul %42, %43, %cst_9 {dimension_numbers = #tpu.dot_dimension_numbers<[1], [0], [0], [1], [0, 0, 1, 1], [], []>} : vector<64x640xbf16>, vector<640x256xbf16>, vector<64x256xf32> -> vector<64x256xf32>
    %45 = vector.extract_strided_slice %44 {offsets = [0, 0], sizes = [32, 256], strides = [1, 1]} : vector<64x256xf32> to vector<32x256xf32>
    %46 = vector.extract_strided_slice %44 {offsets = [32, 0], sizes = [32, 256], strides = [1, 1]} : vector<64x256xf32> to vector<32x256xf32>
    %47 = arith.maximumf %45, %46 : vector<32x256xf32>
    %48 = vector.extract_strided_slice %47 {offsets = [0, 0], sizes = [32, 128], strides = [1, 1]} : vector<32x256xf32> to vector<32x128xf32>
    %49 = vector.extract_strided_slice %47 {offsets = [0, 128], sizes = [32, 128], strides = [1, 1]} : vector<32x256xf32> to vector<32x128xf32>
    %50 = arith.maximumf %48, %49 : vector<32x128xf32>
    %c0_10 = arith.constant 0 : index
    %c0_11 = arith.constant 0 : index
    %51 = vector.load %arg5[%c0_10, %c0_11] : memref<1x128xf32, #tpu.memory_space<vmem>>, vector<1x128xf32>
    %52 = vector.broadcast %51 : vector<1x128xf32> to vector<32x128xf32>
    %53 = arith.addf %50, %52 : vector<32x128xf32>
    %cst_12 = arith.constant 0.000000e+00 : f32
    %54 = vector.broadcast %cst_12 : f32 to vector<32x128xf32>
    %55 = arith.maximumf %53, %54 : vector<32x128xf32>
    %56 = vector.extract_strided_slice %55 {offsets = [0, 0], sizes = [8, 128], strides = [1, 1]} : vector<32x128xf32> to vector<8x128xf32>
    %57 = vector.extract_strided_slice %55 {offsets = [8, 0], sizes = [8, 128], strides = [1, 1]} : vector<32x128xf32> to vector<8x128xf32>
    %58 = vector.extract_strided_slice %55 {offsets = [16, 0], sizes = [8, 128], strides = [1, 1]} : vector<32x128xf32> to vector<8x128xf32>
    %59 = vector.extract_strided_slice %55 {offsets = [24, 0], sizes = [8, 128], strides = [1, 1]} : vector<32x128xf32> to vector<8x128xf32>
    %60 = tpu.concatenate %56, %57, %58, %59 in 1 : vector<8x128xf32>, vector<8x128xf32>, vector<8x128xf32>, vector<8x128xf32> -> vector<8x512xf32>
    %61 = arith.truncf %60 : vector<8x512xf32> to vector<8x512xbf16>
    %c0_13 = arith.constant 0 : index
    %c0_14 = arith.constant 0 : index
    %62 = vector.load %arg6[%c0_13, %c0_14] : memref<512x128xbf16, #tpu.memory_space<vmem>>, vector<512x128xbf16>
    %cst_15 = arith.constant dense<0.000000e+00> : vector<8x128xf32>
    %63 = tpu.matmul %61, %62, %cst_15 {dimension_numbers = #tpu.dot_dimension_numbers<[1], [0], [0], [1], [0, 0, 1, 1], [], []>} : vector<8x512xbf16>, vector<512x128xbf16>, vector<8x128xf32> -> vector<8x128xf32>
    %c0_16 = arith.constant 0 : index
    %c0_17 = arith.constant 0 : index
    %64 = vector.load %arg7[%c0_16, %c0_17] : memref<1x128xf32, #tpu.memory_space<vmem>>, vector<1x128xf32>
    %65 = vector.broadcast %64 : vector<1x128xf32> to vector<8x128xf32>
    %66 = arith.addf %63, %65 : vector<8x128xf32>
    %cst_18 = arith.constant 0.000000e+00 : f32
    %67 = vector.broadcast %cst_18 : f32 to vector<8x128xf32>
    %68 = arith.maximumf %66, %67 : vector<8x128xf32>
    %69 = arith.truncf %68 : vector<8x128xf32> to vector<8x128xbf16>
    %c0_19 = arith.constant 0 : index
    %c0_20 = arith.constant 0 : index
    %70 = vector.load %arg8[%c0_19, %c0_20] : memref<128x128xbf16, #tpu.memory_space<vmem>>, vector<128x128xbf16>
    %cst_21 = arith.constant dense<0.000000e+00> : vector<8x128xf32>
    %71 = tpu.matmul %69, %70, %cst_21 {dimension_numbers = #tpu.dot_dimension_numbers<[1], [0], [0], [1], [0, 0, 1, 1], [], []>} : vector<8x128xbf16>, vector<128x128xbf16>, vector<8x128xf32> -> vector<8x128xf32>
    %c0_22 = arith.constant 0 : index
    %c0_23 = arith.constant 0 : index
    %72 = vector.load %arg9[%c0_22, %c0_23] : memref<1x128xf32, #tpu.memory_space<vmem>>, vector<1x128xf32>
    %73 = vector.broadcast %72 : vector<1x128xf32> to vector<8x128xf32>
    %74 = arith.addf %71, %73 : vector<8x128xf32>
    %c0_24 = arith.constant 0 : index
    %c0_25 = arith.constant 0 : index
    %75 = vector.load %arg10[%c0_24, %c0_25] : memref<8x128xf32, #tpu.memory_space<vmem>>, vector<8x128xf32>
    tpu.vector_store %arg10[%c0_24, %c0_25], %74 {strides = array<i32>} : memref<8x128xf32, #tpu.memory_space<vmem>>, vector<8x128xf32>,
    return
  }
  func.func @transform_0(%arg0: i32) -> (i32, i32, i32) {
    %c0_i32 = arith.constant 0 : i32
    %c0_i32_0 = arith.constant 0 : i32
    %c0_i32_1 = arith.constant 0 : i32
    return %arg0, %c0_i32, %c0_i32_0 : i32, i32, i32
  }
  func.func @transform_1(%arg0: i32) -> (i32, i32) {
    %c0_i32 = arith.constant 0 : i32
    %c0_i32_0 = arith.constant 0 : i32
    %c0_i32_1 = arith.constant 0 : i32
    return %c0_i32, %c0_i32_0 : i32, i32
  }
  func.func @transform_2(%arg0: i32) -> (i32, i32) {
    %c0_i32 = arith.constant 0 : i32
    %c0_i32_0 = arith.constant 0 : i32
    %c0_i32_1 = arith.constant 0 : i32
    return %c0_i32, %c0_i32_0 : i32, i32
  }
  func.func @transform_3(%arg0: i32) -> (i32, i32) {
    %c0_i32 = arith.constant 0 : i32
    %c0_i32_0 = arith.constant 0 : i32
    %c0_i32_1 = arith.constant 0 : i32
    return %c0_i32, %c0_i32_0 : i32, i32
  }
  func.func @transform_4(%arg0: i32) -> (i32, i32) {
    %c0_i32 = arith.constant 0 : i32
    %c0_i32_0 = arith.constant 0 : i32
    %c0_i32_1 = arith.constant 0 : i32
    return %c0_i32, %c0_i32_0 : i32, i32
  }
  func.func @transform_5(%arg0: i32) -> (i32, i32) {
    %c0_i32 = arith.constant 0 : i32
    %c0_i32_0 = arith.constant 0 : i32
    %c0_i32_1 = arith.constant 0 : i32
    return %c0_i32, %c0_i32_0 : i32, i32
  }
  func.func @transform_6(%arg0: i32) -> (i32, i32) {
    %c0_i32 = arith.constant 0 : i32
    %c0_i32_0 = arith.constant 0 : i32
    %c0_i32_1 = arith.constant 0 : i32
    return %c0_i32, %c0_i32_0 : i32, i32
  }
  func.func @transform_7(%arg0: i32) -> (i32, i32) {
    %c0_i32 = arith.constant 0 : i32
    %c0_i32_0 = arith.constant 0 : i32
    %c0_i32_1 = arith.constant 0 : i32
    return %c0_i32, %c0_i32_0 : i32, i32
  }
  func.func @transform_8(%arg0: i32) -> (i32, i32) {
    %c0_i32 = arith.constant 0 : i32
    %c0_i32_0 = arith.constant 0 : i32
    %c0_i32_1 = arith.constant 0 : i32
    return %c0_i32, %c0_i32_0 : i32, i32
  }
  func.func @transform_9(%arg0: i32) -> (i32, i32) {
    %c0_i32 = arith.constant 0 : i32
    %c0_i32_0 = arith.constant 0 : i32
    return %arg0, %c0_i32 : i32, i32
  }
}

</mosaic_0001>

<llo_original>
// kernel: cnn_mnist_forward.1
$region0: #{cnn_mnist_forward.1}
  #allocation0 [shape = 'u32[]', space=smem, size = 0x4, offset = 0x4, fixed_abs, tag = 'smem constant byte address 0x4 - core index']
  #allocation1 [shape = 'u32[144,128]{1,0:T(1,128)}', space=vmem, size = 0x12000, scoped, tag = 'internal scratch']
  %s0 = inlined_call_operand.vmem [shape: bf16[1,192,140], index: 0, kind: input, shape index: {}]
  %s1 = inlined_call_operand.vmem [shape: bf16[140,256], index: 1, kind: input, shape index: {}]
  %s2 = inlined_call_operand.vmem [shape: f32[1,128], index: 2, kind: input, shape index: {}]
  %s3 = inlined_call_operand.vmem [shape: bf16[640,256], index: 3, kind: input, shape index: {}]
  %s4 = inlined_call_operand.vmem [shape: f32[1,128], index: 4, kind: input, shape index: {}]
  %s5 = inlined_call_operand.vmem [shape: bf16[512,128], index: 5, kind: input, shape index: {}]
  %s6 = inlined_call_operand.vmem [shape: f32[1,128], index: 6, kind: input, shape index: {}]
  %s7 = inlined_call_operand.vmem [shape: bf16[128,128], index: 7, kind: input, shape index: {}]
  %s8 = inlined_call_operand.vmem [shape: f32[1,128], index: 8, kind: input, shape index: {}]
  %s9 = inlined_call_operand.vmem [shape: f32[8,128], index: 9, kind: output, shape index: {}]
  %s10 = sld [smem:[#allocation0]]
  $region46: #{cnn_mnist_forward.1} parent=0
    _
  %s12 = ssub.s32 1, %s10
  %s13 = scalar_select 0, %s12, %s10
  // Predicated region
  $region2: #{cnn_mnist_forward.1} parent=0 // pred_check
    _
  $region3: #{cnn_mnist_forward.1} parent=0 // pred_check_branch
    %15 = sbr.rel (0) target = $region5
  $region4: #{cnn_mnist_forward.1} parent=0 // pred_region
    _
  $region5: #{cnn_mnist_forward.1} parent=0 // pred_fallthru
    _
  // Predicated region
  $region6: #{cnn_mnist_forward.1} parent=0 // pred_check
    _
  $region7: #{cnn_mnist_forward.1} parent=0 // pred_check_branch
    %17 = sbr.rel (0) target = $region9
  $region8: #{cnn_mnist_forward.1} parent=0 // pred_region
    _
  $region9: #{cnn_mnist_forward.1} parent=0 // pred_fallthru
    _
  // Predicated region
  $region10: #{cnn_mnist_forward.1} parent=0 // pred_check
    _
  $region11: #{cnn_mnist_forward.1} parent=0 // pred_check_branch
    %19 = sbr.rel (0) target = $region13
  $region12: #{cnn_mnist_forward.1} parent=0 // pred_region
    _
  $region13: #{cnn_mnist_forward.1} parent=0 // pred_fallthru
    _
  // Predicated region
  $region14: #{cnn_mnist_forward.1} parent=0 // pred_check
    _
  $region15: #{cnn_mnist_forward.1} parent=0 // pred_check_branch
    %21 = sbr.rel (0) target = $region17
  $region16: #{cnn_mnist_forward.1} parent=0 // pred_region
    _
  $region17: #{cnn_mnist_forward.1} parent=0 // pred_fallthru
    _
  // Predicated region
  $region18: #{cnn_mnist_forward.1} parent=0 // pred_check
    _
  $region19: #{cnn_mnist_forward.1} parent=0 // pred_check_branch
    %23 = sbr.rel (0) target = $region21
  $region20: #{cnn_mnist_forward.1} parent=0 // pred_region
    _
  $region21: #{cnn_mnist_forward.1} parent=0 // pred_fallthru
    _
  // Predicated region
  $region22: #{cnn_mnist_forward.1} parent=0 // pred_check
    _
  $region23: #{cnn_mnist_forward.1} parent=0 // pred_check_branch
    %25 = sbr.rel (0) target = $region25
  $region24: #{cnn_mnist_forward.1} parent=0 // pred_region
    _
  $region25: #{cnn_mnist_forward.1} parent=0 // pred_fallthru
    _
  // Predicated region
  $region26: #{cnn_mnist_forward.1} parent=0 // pred_check
    _
  $region27: #{cnn_mnist_forward.1} parent=0 // pred_check_branch
    %27 = sbr.rel (0) target = $region29
  $region28: #{cnn_mnist_forward.1} parent=0 // pred_region
    _
  $region29: #{cnn_mnist_forward.1} parent=0 // pred_fallthru
    _
  // Predicated region
  $region30: #{cnn_mnist_forward.1} parent=0 // pred_check
    _
  $region31: #{cnn_mnist_forward.1} parent=0 // pred_check_branch
    %29 = sbr.rel (0) target = $region33
  $region32: #{cnn_mnist_forward.1} parent=0 // pred_region
    _
  $region33: #{cnn_mnist_forward.1} parent=0 // pred_fallthru
    _
  // Predicated region
  $region34: #{cnn_mnist_forward.1} parent=0 // pred_check
    _
  $region35: #{cnn_mnist_forward.1} parent=0 // pred_check_branch
    %31 = sbr.rel (0) target = $region37
  $region36: #{cnn_mnist_forward.1} parent=0 // pred_region
    _
  $region37: #{cnn_mnist_forward.1} parent=0 // pred_fallthru
    _
  %v33 = vld [vmem:[%s0] sm:$0xff]
  %v34 = vld [vmem:[%s0 + $0x8] sm:$0xff]
  %v35 = vld [vmem:[%s0 + $0x10] sm:$0xff]
  %v36 = vld [vmem:[%s0 + $0x18] sm:$0xff]
  %v37 = vld [vmem:[%s0 + $0x20] sm:$0xff]
  %v38 = vld [vmem:[%s0 + $0x28] sm:$0xff]
  %v39 = vld [vmem:[%s0 + $0x30] sm:$0xff]
  %v40 = vld [vmem:[%s0 + $0x38] sm:$0xff]
  %v41 = vld [vmem:[%s0 + $0x40] sm:$0xff]
  %v42 = vld [vmem:[%s0 + $0x48] sm:$0xff]
  %v43 = vld [vmem:[%s0 + $0x50] sm:$0xff]
  %v44 = vld [vmem:[%s0 + $0x58] sm:$0xff]
  %v45 = vld [vmem:[%s0 + $0x60] sm:$0xff]
  %v46 = vld [vmem:[%s0 + $0x68] sm:$0xff]
  %v47 = vld [vmem:[%s0 + $0x70] sm:$0xff]
  %v48 = vld [vmem:[%s0 + $0x78] sm:$0xff]
  %v49 = vld [vmem:[%s0 + $0x80] sm:$0xff]
  %v50 = vld [vmem:[%s0 + $0x88] sm:$0xff]
  %v51 = vld [vmem:[%s0 + $0x90] sm:$0xff]
  %v52 = vld [vmem:[%s0 + $0x98] sm:$0xff]
  %v53 = vld [vmem:[%s0 + $0xa0] sm:$0xff]
  %v54 = vld [vmem:[%s0 + $0xa8] sm:$0xff]
  %v55 = vld [vmem:[%s0 + $0xb0] sm:$0xff]
  %v56 = vld [vmem:[%s0 + $0xb8] sm:$0xff]
  %v57 = vld [vmem:[%s1] sm:$0xff]
  %v58 = vld [vmem:[%s1 + $0x8] sm:$0xff]
  %v59 = vld [vmem:[%s1 + $0x10] sm:$0xff]
  %v60 = vld [vmem:[%s1 + $0x18] sm:$0xff]
  %v61 = vld [vmem:[%s1 + $0x20] sm:$0xff]
  %v62 = vld [vmem:[%s1 + $0x28] sm:$0xff]
  %v63 = vld [vmem:[%s1 + $0x30] sm:$0xff]
  %v64 = vld [vmem:[%s1 + $0x38] sm:$0xff]
  %v65 = vld [vmem:[%s1 + $0x40] sm:$0xff]
  %v66 = vld [vmem:[%s1 + $0x48] sm:$0xff]
  %v67 = vld [vmem:[%s1 + $0x50] sm:$0xff]
  %v68 = vld [vmem:[%s1 + $0x58] sm:$0xff]
  %v69 = vld [vmem:[%s1 + $0x60] sm:$0xff]
  %v70 = vld [vmem:[%s1 + $0x68] sm:$0xff]
  %v71 = vld [vmem:[%s1 + $0x70] sm:$0xff]
  %v72 = vld [vmem:[%s1 + $0x78] sm:$0xff]
  %v73 = vld [vmem:[%s1 + $0x80] sm:$0xff]
  %v74 = vld [vmem:[%s1 + $0x88] sm:$0x33]
  %v99 = vunpack.c.l.b16 %v33
  %v100 = vunpack.c.h.b16 %v33
  %v101 = vunpack.c.l.b16 %v34
  %v102 = vunpack.c.h.b16 %v34
  %v103 = vunpack.c.l.b16 %v35
  %v104 = vunpack.c.h.b16 %v35
  %v105 = vunpack.c.l.b16 %v36
  %v106 = vunpack.c.h.b16 %v36
  %v107 = vunpack.c.l.b16 %v37
  %v108 = vunpack.c.h.b16 %v37
  %v109 = vunpack.c.l.b16 %v38
  %v110 = vunpack.c.h.b16 %v38
  %v111 = vunpack.c.l.b16 %v39
  %v112 = vunpack.c.h.b16 %v39
  %v113 = vunpack.c.l.b16 %v40
  %v114 = vunpack.c.h.b16 %v40
  %v115 = vunpack.c.l.b16 %v41
  %v116 = vunpack.c.h.b16 %v41
  %v117 = vunpack.c.l.b16 %v42
  %v118 = vunpack.c.h.b16 %v42
  %v119 = vunpack.c.l.b16 %v43
  %v120 = vunpack.c.h.b16 %v43
  %v121 = vunpack.c.l.b16 %v44
  %v122 = vunpack.c.h.b16 %v44
  %v123 = vunpack.c.l.b16 %v45
  %v124 = vunpack.c.h.b16 %v45
  %v125 = vunpack.c.l.b16 %v46
  %v126 = vunpack.c.h.b16 %v46
  %v127 = vunpack.c.l.b16 %v47
  %v128 = vunpack.c.h.b16 %v47
  %v129 = vunpack.c.l.b16 %v48
  %v130 = vunpack.c.h.b16 %v48
  %v131 = vunpack.c.l.b16 %v49
  %v132 = vunpack.c.h.b16 %v49
  %v133 = vunpack.c.l.b16 %v50
  %v134 = vunpack.c.h.b16 %v50
  %v135 = vunpack.c.l.b16 %v51
  %v136 = vunpack.c.h.b16 %v51
  %v137 = vunpack.c.l.b16 %v52
  %v138 = vunpack.c.h.b16 %v52
  %v139 = vunpack.c.l.b16 %v53
  %v140 = vunpack.c.h.b16 %v53
  %v141 = vunpack.c.l.b16 %v54
  %v142 = vunpack.c.h.b16 %v54
  %v143 = vunpack.c.l.b16 %v55
  %v144 = vunpack.c.h.b16 %v55
  %v145 = vunpack.c.l.b16 %v56
  %v146 = vunpack.c.h.b16 %v56
  %v147 = vpack.c.b16 %v101, %v99
  %v148 = vpack.c.b16 %v102, %v100
  %v149 = vpack.c.b16 %v105, %v103
  %v150 = vpack.c.b16 %v106, %v104
  %v151 = vpack.c.b16 %v109, %v107
  %v152 = vpack.c.b16 %v110, %v108
  %v153 = vpack.c.b16 %v113, %v111
  %v154 = vpack.c.b16 %v114, %v112
  %v155 = vpack.c.b16 %v117, %v115
  %v156 = vpack.c.b16 %v118, %v116
  %v157 = vpack.c.b16 %v121, %v119
  %v158 = vpack.c.b16 %v122, %v120
  %v159 = vpack.c.b16 %v125, %v123
  %v160 = vpack.c.b16 %v126, %v124
  %v161 = vpack.c.b16 %v129, %v127
  %v162 = vpack.c.b16 %v130, %v128
  %v163 = vpack.c.b16 %v133, %v131
  %v164 = vpack.c.b16 %v134, %v132
  %v165 = vpack.c.b16 %v137, %v135
  %v166 = vpack.c.b16 %v138, %v136
  %v167 = vpack.c.b16 %v141, %v139
  %v168 = vpack.c.b16 %v142, %v140
  %v169 = vpack.c.b16 %v145, %v143
  %v170 = vpack.c.b16 %v146, %v144
  %v201 = vunpack.c.l.b16 %v57
  %v202 = vunpack.c.h.b16 %v57
  %v203 = vunpack.c.l.b16 %v58
  %v204 = vunpack.c.h.b16 %v58
  %v205 = vunpack.c.l.b16 %v59
  %v206 = vunpack.c.h.b16 %v59
  %v207 = vunpack.c.l.b16 %v60
  %v208 = vunpack.c.h.b16 %v60
  %v209 = vunpack.c.l.b16 %v61
  %v210 = vunpack.c.h.b16 %v61
  %v211 = vunpack.c.l.b16 %v62
  %v212 = vunpack.c.h.b16 %v62
  %v213 = vunpack.c.l.b16 %v63
  %v214 = vunpack.c.h.b16 %v63
  %v215 = vunpack.c.l.b16 %v64
  %v216 = vunpack.c.h.b16 %v64
  %v217 = vunpack.c.l.b16 %v65
  %v218 = vunpack.c.h.b16 %v65
  %v219 = vunpack.c.l.b16 %v66
  %v220 = vunpack.c.h.b16 %v66
  %v221 = vunpack.c.l.b16 %v67
  %v222 = vunpack.c.h.b16 %v67
  %v223 = vunpack.c.l.b16 %v68
  %v224 = vunpack.c.h.b16 %v68
  %v225 = vunpack.c.l.b16 %v69
  %v226 = vunpack.c.h.b16 %v69
  %v227 = vunpack.c.l.b16 %v70
  %v228 = vunpack.c.h.b16 %v70
  %v229 = vunpack.c.l.b16 %v71
  %v230 = vunpack.c.h.b16 %v71
  %v231 = vunpack.c.l.b16 %v72
  %v232 = vunpack.c.h.b16 %v72
  %v233 = vunpack.c.l.b16 %v73
  %v234 = vunpack.c.h.b16 %v73
  %v235 = vunpack.c.l.b16 %v74
  %v236 = vunpack.c.h.b16 %v74
  %v237 = vpack.c.b16 %v203, %v201
  %v238 = vpack.c.b16 %v204, %v202
  %v239 = vpack.c.b16 %v207, %v205
  %v240 = vpack.c.b16 %v208, %v206
  %v241 = vpack.c.b16 %v211, %v209
  %v242 = vpack.c.b16 %v212, %v210
  %v243 = vpack.c.b16 %v215, %v213
  %v244 = vpack.c.b16 %v216, %v214
  %v245 = vpack.c.b16 %v219, %v217
  %v246 = vpack.c.b16 %v220, %v218
  %v247 = vpack.c.b16 %v223, %v221
  %v248 = vpack.c.b16 %v224, %v222
  %v249 = vpack.c.b16 %v227, %v225
  %v250 = vpack.c.b16 %v228, %v226
  %v251 = vpack.c.b16 %v231, %v229
  %v252 = vpack.c.b16 %v232, %v230
  %v253 = vpack.c.b16 %v235, %v233
  %v254 = vpack.c.b16 %v236, %v234
  %vm271 = vcmask 97280
  %v273 = vsel %vm271, %v148, 0
  %v276 = vsel %vm271, %v150, 0
  %v279 = vsel %vm271, %v152, 0
  %v282 = vsel %vm271, %v154, 0
  %v285 = vsel %vm271, %v156, 0
  %v288 = vsel %vm271, %v158, 0
  %v291 = vsel %vm271, %v160, 0
  %v294 = vsel %vm271, %v162, 0
  %v297 = vsel %vm271, %v164, 0
  %v300 = vsel %vm271, %v166, 0
  %v303 = vsel %vm271, %v168, 0
  %v306 = vsel %vm271, %v170, 0
  %vm308 = vcmask 1045504
  %v310 = vsel %vm308, %v253, 0
  %v313 = vsel %vm308, %v254, 0
  %315 = vmatprep.subr.bf16.mxu0 %v238
  %316 = vmatpush1.bf16.msra.mxu0 %v237
  %317 = vmatprep.subr.bf16.mxu0 %v240
  %318 = vmatpush1.bf16.msra.mxu0 %v239
  %319 = vmatprep.subr.bf16.mxu0 %v242
  %320 = vmatpush1.bf16.msra.mxu0 %v241
  %321 = vmatprep.subr.bf16.mxu0 %v244
  %322 = vmatpush1.bf16.msra.mxu0 %v243
  %323 = vmatprep.subr.bf16.mxu0 %v246
  %324 = vmatpush1.bf16.msra.mxu0 %v245
  %325 = vmatprep.subr.bf16.mxu0 %v248
  %326 = vmatpush1.bf16.msra.mxu0 %v247
  %327 = vmatprep.subr.bf16.mxu0 %v250
  %328 = vmatpush1.bf16.msra.mxu0 %v249
  %329 = vmatprep.subr.bf16.mxu0 %v252
  %330 = vmatpush1.bf16.msra.mxu0 %v251
  %331 = vmatprep.subr.bf16.mxu0 %v313
  %332 = vmatpush1.bf16.msra.mxu0 %v310
  %333 = vmatprep.subr.bf16.mxu0 0
  %334 = vmatpush1.bf16.msra.mxu0 0
  %335 = vmatprep.subr.bf16.mxu0 0
  %336 = vmatpush1.bf16.msra.mxu0 0
  %337 = vmatprep.subr.bf16.mxu0 0
  %338 = vmatpush1.bf16.msra.mxu0 0
  %339 = vmatprep.subr.bf16.mxu0 0
  %340 = vmatpush1.bf16.msra.mxu0 0
  %341 = vmatprep.subr.bf16.mxu0 0
  %342 = vmatpush1.bf16.msra.mxu0 0
  %343 = vmatprep.subr.bf16.mxu0 0
  %344 = vmatpush1.bf16.msra.mxu0 0
  %345 = vmatprep.subr.bf16.mxu0 0
  %346 = vmatpush1.bf16.msra.mxu0 0
  %347 = vmatprep.mubr.bf16.mxu0 %v273
  %348 = vmatmul.mubr.bf16.gmra.mrb[0].mxu0 %v147
  %v349 = vpop.f32.mrb[0].mxu0
  %v350 = vadd.f32 0.0, %v349
  %v351 = vpop.f32.mrb[0].mxu0
  %v352 = vadd.f32 0.0, %v351
  %v353 = vpop.f32.mrb[0].mxu0
  %v354 = vadd.f32 0.0, %v353
  %v355 = vpop.f32.mrb[0].mxu0
  %v356 = vadd.f32 0.0, %v355
  %357 = vmatprep.mubr.bf16.mxu0 %v276
  %358 = vmatmul.mubr.bf16.gmra.mrb[0].mxu0 %v149
  %v359 = vpop.f32.mrb[0].mxu0
  %v360 = vadd.f32 0.0, %v359
  %v361 = vpop.f32.mrb[0].mxu0
  %v362 = vadd.f32 0.0, %v361
  %v363 = vpop.f32.mrb[0].mxu0
  %v364 = vadd.f32 0.0, %v363
  %v365 = vpop.f32.mrb[0].mxu0
  %v366 = vadd.f32 0.0, %v365
  %367 = vmatprep.mubr.bf16.mxu0 %v279
  %368 = vmatmul.mubr.bf16.gmra.mrb[0].mxu0 %v151
  %v369 = vpop.f32.mrb[0].mxu0
  %v370 = vadd.f32 0.0, %v369
  %v371 = vpop.f32.mrb[0].mxu0
  %v372 = vadd.f32 0.0, %v371
  %v373 = vpop.f32.mrb[0].mxu0
  %v374 = vadd.f32 0.0, %v373
  %v375 = vpop.f32.mrb[0].mxu0
  %v376 = vadd.f32 0.0, %v375
  %377 = vmatprep.mubr.bf16.mxu0 %v282
  %378 = vmatmul.mubr.bf16.gmra.mrb[0].mxu0 %v153
  %v379 = vpop.f32.mrb[0].mxu0
  %v380 = vadd.f32 0.0, %v379
  %v381 = vpop.f32.mrb[0].mxu0
  %v382 = vadd.f32 0.0, %v381
  %v383 = vpop.f32.mrb[0].mxu0
  %v384 = vadd.f32 0.0, %v383
  %v385 = vpop.f32.mrb[0].mxu0
  %v386 = vadd.f32 0.0, %v385
  %387 = vmatprep.mubr.bf16.mxu0 %v285
  %388 = vmatmul.mubr.bf16.gmra.mrb[0].mxu0 %v155
  %v389 = vpop.f32.mrb[0].mxu0
  %v390 = vadd.f32 0.0, %v389
  %v391 = vpop.f32.mrb[0].mxu0
  %v392 = vadd.f32 0.0, %v391
  %v393 = vpop.f32.mrb[0].mxu0
  %v394 = vadd.f32 0.0, %v393
  %v395 = vpop.f32.mrb[0].mxu0
  %v396 = vadd.f32 0.0, %v395
  %397 = vmatprep.mubr.bf16.mxu0 %v288
  %398 = vmatmul.mubr.bf16.gmra.mrb[0].mxu0 %v157
  %v399 = vpop.f32.mrb[0].mxu0
  %v400 = vadd.f32 0.0, %v399
  %v401 = vpop.f32.mrb[0].mxu0
  %v402 = vadd.f32 0.0, %v401
  %v403 = vpop.f32.mrb[0].mxu0
  %v404 = vadd.f32 0.0, %v403
  %v405 = vpop.f32.mrb[0].mxu0
  %v406 = vadd.f32 0.0, %v405
  %407 = vmatprep.mubr.bf16.mxu0 %v291
  %408 = vmatmul.mubr.bf16.gmra.mrb[0].mxu0 %v159
  %v409 = vpop.f32.mrb[0].mxu0
  %v410 = vadd.f32 0.0, %v409
  %v411 = vpop.f32.mrb[0].mxu0
  %v412 = vadd.f32 0.0, %v411
  %v413 = vpop.f32.mrb[0].mxu0
  %v414 = vadd.f32 0.0, %v413
  %v415 = vpop.f32.mrb[0].mxu0
  %v416 = vadd.f32 0.0, %v415
  %417 = vmatprep.mubr.bf16.mxu0 %v294
  %418 = vmatmul.mubr.bf16.gmra.mrb[0].mxu0 %v161
  %v419 = vpop.f32.mrb[0].mxu0
  %v420 = vadd.f32 0.0, %v419
  %v421 = vpop.f32.mrb[0].mxu0
  %v422 = vadd.f32 0.0, %v421
  %v423 = vpop.f32.mrb[0].mxu0
  %v424 = vadd.f32 0.0, %v423
  %v425 = vpop.f32.mrb[0].mxu0
  %v426 = vadd.f32 0.0, %v425
  %427 = vmatprep.mubr.bf16.mxu0 %v297
  %428 = vmatmul.mubr.bf16.gmra.mrb[0].mxu0 %v163
  %v429 = vpop.f32.mrb[0].mxu0
  %v430 = vadd.f32 0.0, %v429
  %v431 = vpop.f32.mrb[0].mxu0
  %v432 = vadd.f32 0.0, %v431
  %v433 = vpop.f32.mrb[0].mxu0
  %v434 = vadd.f32 0.0, %v433
  %v435 = vpop.f32.mrb[0].mxu0
  %v436 = vadd.f32 0.0, %v435
  %437 = vmatprep.mubr.bf16.mxu0 %v300
  %438 = vmatmul.mubr.bf16.gmra.mrb[0].mxu0 %v165
  %v439 = vpop.f32.mrb[0].mxu0
  %v440 = vadd.f32 0.0, %v439
  %v441 = vpop.f32.mrb[0].mxu0
  %v442 = vadd.f32 0.0, %v441
  %v443 = vpop.f32.mrb[0].mxu0
  %v444 = vadd.f32 0.0, %v443
  %v445 = vpop.f32.mrb[0].mxu0
  %v446 = vadd.f32 0.0, %v445
  %447 = vmatprep.mubr.bf16.mxu0 %v303
  %448 = vmatmul.mubr.bf16.gmra.mrb[0].mxu0 %v167
  %v449 = vpop.f32.mrb[0].mxu0
  %v450 = vadd.f32 0.0, %v449
  %v451 = vpop.f32.mrb[0].mxu0
  %v452 = vadd.f32 0.0, %v451
  %v453 = vpop.f32.mrb[0].mxu0
  %v454 = vadd.f32 0.0, %v453
  %v455 = vpop.f32.mrb[0].mxu0
  %v456 = vadd.f32 0.0, %v455
  %457 = vmatprep.mubr.bf16.mxu0 %v306
  %458 = vmatmul.mubr.bf16.gmra.mrb[0].mxu0 %v169
  %v459 = vpop.f32.mrb[0].mxu0
  %v460 = vadd.f32 0.0, %v459
  %v461 = vpop.f32.mrb[0].mxu0
  %v462 = vadd.f32 0.0, %v461
  %v463 = vpop.f32.mrb[0].mxu0
  %v464 = vadd.f32 0.0, %v463
  %v465 = vpop.f32.mrb[0].mxu0
  %v466 = vadd.f32 0.0, %v465
  %467 = vdwg.mxu0
  %v468 = vmax.f32 %v350, %v410
  %v469 = vmax.f32 %v352, %v412
  %v470 = vmax.f32 %v354, %v414
  %v471 = vmax.f32 %v356, %v416
  %v472 = vmax.f32 %v360, %v420
  %v473 = vmax.f32 %v362, %v422
  %v474 = vmax.f32 %v364, %v424
  %v475 = vmax.f32 %v366, %v426
  %v476 = vmax.f32 %v370, %v430
  %v477 = vmax.f32 %v372, %v432
  %v478 = vmax.f32 %v374, %v434
  %v479 = vmax.f32 %v376, %v436
  %v480 = vmax.f32 %v380, %v440
  %v481 = vmax.f32 %v382, %v442
  %v482 = vmax.f32 %v384, %v444
  %v483 = vmax.f32 %v386, %v446
  %v484 = vmax.f32 %v390, %v450
  %v485 = vmax.f32 %v392, %v452
  %v486 = vmax.f32 %v394, %v454
  %v487 = vmax.f32 %v396, %v456
  %v488 = vmax.f32 %v400, %v460
  %v489 = vmax.f32 %v402, %v462
  %v490 = vmax.f32 %v404, %v464
  %v491 = vmax.f32 %v406, %v466
  %v492 = vmax.f32 %v468, %v469
  %v493 = vmax.f32 %v470, %v471
  %v494 = vmax.f32 %v472, %v473
  %v495 = vmax.f32 %v474, %v475
  %v496 = vmax.f32 %v476, %v477
  %v497 = vmax.f32 %v478, %v479
  %v498 = vmax.f32 %v480, %v481
  %v499 = vmax.f32 %v482, %v483
  %v500 = vmax.f32 %v484, %v485
  %v501 = vmax.f32 %v486, %v487
  %v502 = vmax.f32 %v488, %v489
  %v503 = vmax.f32 %v490, %v491
  %v504 = vld [vmem:[%s2] sm:$0x1]
  %v506 = vlaneseq
  %v507 = vshrl.u32 %v506, 7
  %v508 = vsub.s32 0, %v507
  %v509 = vrot.slane %v504, %v508
  %v511 = vadd.f32 %v492, %v509
  %v512 = vadd.f32 %v493, %v509
  %v513 = vadd.f32 %v494, %v509
  %v514 = vadd.f32 %v495, %v509
  %v515 = vadd.f32 %v496, %v509
  %v516 = vadd.f32 %v497, %v509
  %v517 = vadd.f32 %v498, %v509
  %v518 = vadd.f32 %v499, %v509
  %v519 = vadd.f32 %v500, %v509
  %v520 = vadd.f32 %v501, %v509
  %v521 = vadd.f32 %v502, %v509
  %v522 = vadd.f32 %v503, %v509
  %v523 = vmax.f32 %v511, 0.0
  %v524 = vmax.f32 %v512, 0.0
  %v525 = vmax.f32 %v513, 0.0
  %v526 = vmax.f32 %v514, 0.0
  %v527 = vmax.f32 %v515, 0.0
  %v528 = vmax.f32 %v516, 0.0
  %v529 = vmax.f32 %v517, 0.0
  %v530 = vmax.f32 %v518, 0.0
  %v531 = vmax.f32 %v519, 0.0
  %v532 = vmax.f32 %v520, 0.0
  %v533 = vmax.f32 %v521, 0.0
  %v534 = vmax.f32 %v522, 0.0
  %v535 = vpack.c.bf16 %v525, %v523
  %v536 = vpack.c.bf16 %v526, %v524
  %v537 = vpack.c.bf16 %v527, %v525
  %v538 = vpack.c.bf16 %v528, %v526
  %v539 = vpack.c.bf16 %v529, %v527
  %v540 = vpack.c.bf16 %v530, %v528
  %v541 = vpack.c.bf16 %v531, %v529
  %v542 = vpack.c.bf16 %v532, %v530
  %v543 = vpack.c.bf16 %v533, %v531
  %v544 = vpack.c.bf16 %v534, %v532
  %v545 = vld [vmem:[%s3] sm:$0xff]
  %v546 = vld [vmem:[%s3 + $0x8] sm:$0xff]
  %v547 = vld [vmem:[%s3 + $0x10] sm:$0xff]
  %v548 = vld [vmem:[%s3 + $0x18] sm:$0xff]
  %v549 = vld [vmem:[%s3 + $0x20] sm:$0xff]
  %v550 = vld [vmem:[%s3 + $0x28] sm:$0xff]
  %v551 = vld [vmem:[%s3 + $0x30] sm:$0xff]
  %v552 = vld [vmem:[%s3 + $0x38] sm:$0xff]
  %v553 = vld [vmem:[%s3 + $0x40] sm:$0xff]
  %v554 = vld [vmem:[%s3 + $0x48] sm:$0xff]
  %v555 = vld [vmem:[%s3 + $0x50] sm:$0xff]
  %v556 = vld [vmem:[%s3 + $0x58] sm:$0xff]
  %v557 = vld [vmem:[%s3 + $0x60] sm:$0xff]
  %v558 = vld [vmem:[%s3 + $0x68] sm:$0xff]
  %v559 = vld [vmem:[%s3 + $0x70] sm:$0xff]
  %v560 = vld [vmem:[%s3 + $0x78] sm:$0xff]
  %v561 = vld [vmem:[%s3 + $0x80] sm:$0xff]
  %v562 = vld [vmem:[%s3 + $0x88] sm:$0xff]
  %v563 = vld [vmem:[%s3 + $0x90] sm:$0xff]
  %v564 = vld [vmem:[%s3 + $0x98] sm:$0xff]
  %v565 = vld [vmem:[%s3 + $0xa0] sm:$0xff]
  %v566 = vld [vmem:[%s3 + $0xa8] sm:$0xff]
  %v567 = vld [vmem:[%s3 + $0xb0] sm:$0xff]
  %v568 = vld [vmem:[%s3 + $0xb8] sm:$0xff]
  %v569 = vld [vmem:[%s3 + $0xc0] sm:$0xff]
  %v570 = vld [vmem:[%s3 + $0xc8] sm:$0xff]
  %v571 = vld [vmem:[%s3 + $0xd0] sm:$0xff]
  %v572 = vld [vmem:[%s3 + $0xd8] sm:$0xff]
  %v573 = vld [vmem:[%s3 + $0xe0] sm:$0xff]
  %v574 = vld [vmem:[%s3 + $0xe8] sm:$0xff]
  %v575 = vld [vmem:[%s3 + $0xf0] sm:$0xff]
  %v576 = vld [vmem:[%s3 + $0xf8] sm:$0xff]
  %v577 = vld [vmem:[%s3 + $0x100] sm:$0xff]
  %v578 = vld [vmem:[%s3 + $0x108] sm:$0xff]
  %v579 = vld [vmem:[%s3 + $0x110] sm:$0xff]
  %v580 = vld [vmem:[%s3 + $0x118] sm:$0xff]
  %v581 = vld [vmem:[%s3 + $0x120] sm:$0xff]
  %v582 = vld [vmem:[%s3 + $0x128] sm:$0xff]
  %v583 = vld [vmem:[%s3 + $0x130] sm:$0xff]
  %v584 = vld [vmem:[%s3 + $0x138] sm:$0xff]
  %v585 = vld [vmem:[%s3 + $0x140] sm:$0xff]
  %v586 = vld [vmem:[%s3 + $0x148] sm:$0xff]
  %v587 = vld [vmem:[%s3 + $0x150] sm:$0xff]
  %v588 = vld [vmem:[%s3 + $0x158] sm:$0xff]
  %v589 = vld [vmem:[%s3 + $0x160] sm:$0xff]
  %v590 = vld [vmem:[%s3 + $0x168] sm:$0xff]
  %v591 = vld [vmem:[%s3 + $0x170] sm:$0xff]
  %v592 = vld [vmem:[%s3 + $0x178] sm:$0xff]
  %v593 = vld [vmem:[%s3 + $0x180] sm:$0xff]
  %v594 = vld [vmem:[%s3 + $0x188] sm:$0xff]
  %v595 = vld [vmem:[%s3 + $0x190] sm:$0xff]
  %v596 = vld [vmem:[%s3 + $0x198] sm:$0xff]
  %v597 = vld [vmem:[%s3 + $0x1a0] sm:$0xff]
  %v598 = vld [vmem:[%s3 + $0x1a8] sm:$0xff]
  %v599 = vld [vmem:[%s3 + $0x1b0] sm:$0xff]
  %v600 = vld [vmem:[%s3 + $0x1b8] sm:$0xff]
  %v601 = vld [vmem:[%s3 + $0x1c0] sm:$0xff]
  %v602 = vld [vmem:[%s3 + $0x1c8] sm:$0xff]
  %v603 = vld [vmem:[%s3 + $0x1d0] sm:$0xff]
  %v604 = vld [vmem:[%s3 + $0x1d8] sm:$0xff]
  %v605 = vld [vmem:[%s3 + $0x1e0] sm:$0xff]
  %v606 = vld [vmem:[%s3 + $0x1e8] sm:$0xff]
  %v607 = vld [vmem:[%s3 + $0x1f0] sm:$0xff]
  %v608 = vld [vmem:[%s3 + $0x1f8] sm:$0xff]
  %v609 = vld [vmem:[%s3 + $0x200] sm:$0xff]
  %v610 = vld [vmem:[%s3 + $0x208] sm:$0xff]
  %v611 = vld [vmem:[%s3 + $0x210] sm:$0xff]
  %v612 = vld [vmem:[%s3 + $0x218] sm:$0xff]
  %v613 = vld [vmem:[%s3 + $0x220] sm:$0xff]
  %v614 = vld [vmem:[%s3 + $0x228] sm:$0xff]
  %v615 = vld [vmem:[%s3 + $0x230] sm:$0xff]
  %v616 = vld [vmem:[%s3 + $0x238] sm:$0xff]
  %v617 = vld [vmem:[%s3 + $0x240] sm:$0xff]
  %v618 = vld [vmem:[%s3 + $0x248] sm:$0xff]
  %v619 = vld [vmem:[%s3 + $0x250] sm:$0xff]
  %v620 = vld [vmem:[%s3 + $0x258] sm:$0xff]
  %v621 = vld [vmem:[%s3 + $0x260] sm:$0xff]
  %v622 = vld [vmem:[%s3 + $0x268] sm:$0xff]
  %v623 = vld [vmem:[%s3 + $0x270] sm:$0xff]
  %v624 = vld [vmem:[%s3 + $0x278] sm:$0xff]
  %v705 = vunpack.c.l.b16 %v545
  %v706 = vunpack.c.h.b16 %v545
  %v707 = vunpack.c.l.b16 %v546
  %v708 = vunpack.c.h.b16 %v546
  %v709 = vunpack.c.l.b16 %v547
  %v710 = vunpack.c.h.b16 %v547
  %v711 = vunpack.c.l.b16 %v548
  %v712 = vunpack.c.h.b16 %v548
  %v713 = vunpack.c.l.b16 %v549
  %v714 = vunpack.c.h.b16 %v549
  %v715 = vunpack.c.l.b16 %v550
  %v716 = vunpack.c.h.b16 %v550
  %v717 = vunpack.c.l.b16 %v551
  %v718 = vunpack.c.h.b16 %v551
  %v719 = vunpack.c.l.b16 %v552
  %v720 = vunpack.c.h.b16 %v552
  %v721 = vunpack.c.l.b16 %v553
  %v722 = vunpack.c.h.b16 %v553
  %v723 = vunpack.c.l.b16 %v554
  %v724 = vunpack.c.h.b16 %v554
  %v725 = vunpack.c.l.b16 %v555
  %v726 = vunpack.c.h.b16 %v555
  %v727 = vunpack.c.l.b16 %v556
  %v728 = vunpack.c.h.b16 %v556
  %v729 = vunpack.c.l.b16 %v557
  %v730 = vunpack.c.h.b16 %v557
  %v731 = vunpack.c.l.b16 %v558
  %v732 = vunpack.c.h.b16 %v558
  %v733 = vunpack.c.l.b16 %v559
  %v734 = vunpack.c.h.b16 %v559
  %v735 = vunpack.c.l.b16 %v560
  %v736 = vunpack.c.h.b16 %v560
  %v737 = vunpack.c.l.b16 %v561
  %v738 = vunpack.c.h.b16 %v561
  %v739 = vunpack.c.l.b16 %v562
  %v740 = vunpack.c.h.b16 %v562
  %v741 = vunpack.c.l.b16 %v563
  %v742 = vunpack.c.h.b16 %v563
  %v743 = vunpack.c.l.b16 %v564
  %v744 = vunpack.c.h.b16 %v564
  %v745 = vunpack.c.l.b16 %v565
  %v746 = vunpack.c.h.b16 %v565
  %v747 = vunpack.c.l.b16 %v566
  %v748 = vunpack.c.h.b16 %v566
  %v749 = vunpack.c.l.b16 %v567
  %v750 = vunpack.c.h.b16 %v567
  %v751 = vunpack.c.l.b16 %v568
  %v752 = vunpack.c.h.b16 %v568
  %v753 = vunpack.c.l.b16 %v569
  %v754 = vunpack.c.h.b16 %v569
  %v755 = vunpack.c.l.b16 %v570
  %v756 = vunpack.c.h.b16 %v570
  %v757 = vunpack.c.l.b16 %v571
  %v758 = vunpack.c.h.b16 %v571
  %v759 = vunpack.c.l.b16 %v572
  %v760 = vunpack.c.h.b16 %v572
  %v761 = vunpack.c.l.b16 %v573
  %v762 = vunpack.c.h.b16 %v573
  %v763 = vunpack.c.l.b16 %v574
  %v764 = vunpack.c.h.b16 %v574
  %v765 = vunpack.c.l.b16 %v575
  %v766 = vunpack.c.h.b16 %v575
  %v767 = vunpack.c.l.b16 %v576
  %v768 = vunpack.c.h.b16 %v576
  %v769 = vunpack.c.l.b16 %v577
  %v770 = vunpack.c.h.b16 %v577
  %v771 = vunpack.c.l.b16 %v578
  %v772 = vunpack.c.h.b16 %v578
  %v773 = vunpack.c.l.b16 %v579
  %v774 = vunpack.c.h.b16 %v579
  %v775 = vunpack.c.l.b16 %v580
  %v776 = vunpack.c.h.b16 %v580
  %v777 = vunpack.c.l.b16 %v581
  %v778 = vunpack.c.h.b16 %v581
  %v779 = vunpack.c.l.b16 %v582
  %v780 = vunpack.c.h.b16 %v582
  %v781 = vunpack.c.l.b16 %v583
  %v782 = vunpack.c.h.b16 %v583
  %v783 = vunpack.c.l.b16 %v584
  %v784 = vunpack.c.h.b16 %v584
  %v785 = vunpack.c.l.b16 %v585
  %v786 = vunpack.c.h.b16 %v585
  %v787 = vunpack.c.l.b16 %v586
  %v788 = vunpack.c.h.b16 %v586
  %v789 = vunpack.c.l.b16 %v587
  %v790 = vunpack.c.h.b16 %v587
  %v791 = vunpack.c.l.b16 %v588
  %v792 = vunpack.c.h.b16 %v588
  %v793 = vunpack.c.l.b16 %v589
  %v794 = vunpack.c.h.b16 %v589
  %v795 = vunpack.c.l.b16 %v590
  %v796 = vunpack.c.h.b16 %v590
  %v797 = vunpack.c.l.b16 %v591
  %v798 = vunpack.c.h.b16 %v591
  %v799 = vunpack.c.l.b16 %v592
  %v800 = vunpack.c.h.b16 %v592
  %v801 = vunpack.c.l.b16 %v593
  %v802 = vunpack.c.h.b16 %v593
  %v803 = vunpack.c.l.b16 %v594
  %v804 = vunpack.c.h.b16 %v594
  %v805 = vunpack.c.l.b16 %v595
  %v806 = vunpack.c.h.b16 %v595
  %v807 = vunpack.c.l.b16 %v596
  %v808 = vunpack.c.h.b16 %v596
  %v809 = vunpack.c.l.b16 %v597
  %v810 = vunpack.c.h.b16 %v597
  %v811 = vunpack.c.l.b16 %v598
  %v812 = vunpack.c.h.b16 %v598
  %v813 = vunpack.c.l.b16 %v599
  %v814 = vunpack.c.h.b16 %v599
  %v815 = vunpack.c.l.b16 %v600
  %v816 = vunpack.c.h.b16 %v600
  %v817 = vunpack.c.l.b16 %v601
  %v818 = vunpack.c.h.b16 %v601
  %v819 = vunpack.c.l.b16 %v602
  %v820 = vunpack.c.h.b16 %v602
  %v821 = vunpack.c.l.b16 %v603
  %v822 = vunpack.c.h.b16 %v603
  %v823 = vunpack.c.l.b16 %v604
  %v824 = vunpack.c.h.b16 %v604
  %v825 = vunpack.c.l.b16 %v605
  %v826 = vunpack.c.h.b16 %v605
  %v827 = vunpack.c.l.b16 %v606
  %v828 = vunpack.c.h.b16 %v606
  %v829 = vunpack.c.l.b16 %v607
  %v830 = vunpack.c.h.b16 %v607
  %v831 = vunpack.c.l.b16 %v608
  %v832 = vunpack.c.h.b16 %v608
  %v833 = vunpack.c.l.b16 %v609
  %v834 = vunpack.c.h.b16 %v609
  %v835 = vunpack.c.l.b16 %v610
  %v836 = vunpack.c.h.b16 %v610
  %v837 = vunpack.c.l.b16 %v611
  %v838 = vunpack.c.h.b16 %v611
  %v839 = vunpack.c.l.b16 %v612
  %v840 = vunpack.c.h.b16 %v612
  %v841 = vunpack.c.l.b16 %v613
  %v842 = vunpack.c.h.b16 %v613
  %v843 = vunpack.c.l.b16 %v614
  %v844 = vunpack.c.h.b16 %v614
  %v845 = vunpack.c.l.b16 %v615
  %v846 = vunpack.c.h.b16 %v615
  %v847 = vunpack.c.l.b16 %v616
  %v848 = vunpack.c.h.b16 %v616
  %v849 = vunpack.c.l.b16 %v617
  %v850 = vunpack.c.h.b16 %v617
  %v851 = vunpack.c.l.b16 %v618
  %v852 = vunpack.c.h.b16 %v618
  %v853 = vunpack.c.l.b16 %v619
  %v854 = vunpack.c.h.b16 %v619
  %v855 = vunpack.c.l.b16 %v620
  %v856 = vunpack.c.h.b16 %v620
  %v857 = vunpack.c.l.b16 %v621
  %v858 = vunpack.c.h.b16 %v621
  %v859 = vunpack.c.l.b16 %v622
  %v860 = vunpack.c.h.b16 %v622
  %v861 = vunpack.c.l.b16 %v623
  %v862 = vunpack.c.h.b16 %v623
  %v863 = vunpack.c.l.b16 %v624
  %v864 = vunpack.c.h.b16 %v624
  %v865 = vpack.c.b16 %v707, %v705
  %v866 = vpack.c.b16 %v708, %v706
  %v867 = vpack.c.b16 %v711, %v709
  %v868 = vpack.c.b16 %v712, %v710
  %v869 = vpack.c.b16 %v715, %v713
  %v870 = vpack.c.b16 %v716, %v714
  %v871 = vpack.c.b16 %v719, %v717
  %v872 = vpack.c.b16 %v720, %v718
  %v873 = vpack.c.b16 %v723, %v721
  %v874 = vpack.c.b16 %v724, %v722
  %v875 = vpack.c.b16 %v727, %v725
  %v876 = vpack.c.b16 %v728, %v726
  %v877 = vpack.c.b16 %v731, %v729
  %v878 = vpack.c.b16 %v732, %v730
  %v879 = vpack.c.b16 %v735, %v733
  %v880 = vpack.c.b16 %v736, %v734
  %v881 = vpack.c.b16 %v739, %v737
  %v882 = vpack.c.b16 %v740, %v738
  %v883 = vpack.c.b16 %v743, %v741
  %v884 = vpack.c.b16 %v744, %v742
  %v885 = vpack.c.b16 %v747, %v745
  %v886 = vpack.c.b16 %v748, %v746
  %v887 = vpack.c.b16 %v751, %v749
  %v888 = vpack.c.b16 %v752, %v750
  %v889 = vpack.c.b16 %v755, %v753
  %v890 = vpack.c.b16 %v756, %v754
  %v891 = vpack.c.b16 %v759, %v757
  %v892 = vpack.c.b16 %v760, %v758
  %v893 = vpack.c.b16 %v763, %v761
  %v894 = vpack.c.b16 %v764, %v762
  %v895 = vpack.c.b16 %v767, %v765
  %v896 = vpack.c.b16 %v768, %v766
  %v897 = vpack.c.b16 %v771, %v769
  %v898 = vpack.c.b16 %v772, %v770
  %v899 = vpack.c.b16 %v775, %v773
  %v900 = vpack.c.b16 %v776, %v774
  %v901 = vpack.c.b16 %v779, %v777
  %v902 = vpack.c.b16 %v780, %v778
  %v903 = vpack.c.b16 %v783, %v781
  %v904 = vpack.c.b16 %v784, %v782
  %v905 = vpack.c.b16 %v787, %v785
  %v906 = vpack.c.b16 %v788, %v786
  %v907 = vpack.c.b16 %v791, %v789
  %v908 = vpack.c.b16 %v792, %v790
  %v909 = vpack.c.b16 %v795, %v793
  %v910 = vpack.c.b16 %v796, %v794
  %v911 = vpack.c.b16 %v799, %v797
  %v912 = vpack.c.b16 %v800, %v798
  %v913 = vpack.c.b16 %v803, %v801
  %v914 = vpack.c.b16 %v804, %v802
  %v915 = vpack.c.b16 %v807, %v805
  %v916 = vpack.c.b16 %v808, %v806
  %v917 = vpack.c.b16 %v811, %v809
  %v918 = vpack.c.b16 %v812, %v810
  %v919 = vpack.c.b16 %v815, %v813
  %v920 = vpack.c.b16 %v816, %v814
  %v921 = vpack.c.b16 %v819, %v817
  %v922 = vpack.c.b16 %v820, %v818
  %v923 = vpack.c.b16 %v823, %v821
  %v924 = vpack.c.b16 %v824, %v822
  %v925 = vpack.c.b16 %v827, %v825
  %v926 = vpack.c.b16 %v828, %v826
  %v927 = vpack.c.b16 %v831, %v829
  %v928 = vpack.c.b16 %v832, %v830
  %v929 = vpack.c.b16 %v835, %v833
  %v930 = vpack.c.b16 %v836, %v834
  %v931 = vpack.c.b16 %v839, %v837
  %v932 = vpack.c.b16 %v840, %v838
  %v933 = vpack.c.b16 %v843, %v841
  %v934 = vpack.c.b16 %v844, %v842
  %v935 = vpack.c.b16 %v847, %v845
  %v936 = vpack.c.b16 %v848, %v846
  %v937 = vpack.c.b16 %v851, %v849
  %v938 = vpack.c.b16 %v852, %v850
  %v939 = vpack.c.b16 %v855, %v853
  %v940 = vpack.c.b16 %v856, %v854
  %v941 = vpack.c.b16 %v859, %v857
  %v942 = vpack.c.b16 %v860, %v858
  %v943 = vpack.c.b16 %v863, %v861
  %v944 = vpack.c.b16 %v864, %v862
  %1025 = vmatprep.subr.bf16.mxu0 %v866
  %1026 = vmatpush1.bf16.msra.mxu0 %v865
  %1027 = vmatprep.subr.bf16.mxu0 %v868
  %1028 = vmatpush1.bf16.msra.mxu0 %v867
  %1029 = vmatprep.subr.bf16.mxu0 %v870
  %1030 = vmatpush1.bf16.msra.mxu0 %v869
  %1031 = vmatprep.subr.bf16.mxu0 %v872
  %1032 = vmatpush1.bf16.msra.mxu0 %v871
  %1033 = vmatprep.subr.bf16.mxu0 %v874
  %1034 = vmatpush1.bf16.msra.mxu0 %v873
  %1035 = vmatprep.subr.bf16.mxu0 %v876
  %1036 = vmatpush1.bf16.msra.mxu0 %v875
  %1037 = vmatprep.subr.bf16.mxu0 %v878
  %1038 = vmatpush1.bf16.msra.mxu0 %v877
  %1039 = vmatprep.subr.bf16.mxu0 %v880
  %1040 = vmatpush1.bf16.msra.mxu0 %v879
  %1041 = vmatprep.subr.bf16.mxu0 %v882
  %1042 = vmatpush1.bf16.msra.mxu0 %v881
  %1043 = vmatprep.subr.bf16.mxu0 %v884
  %1044 = vmatpush1.bf16.msra.mxu0 %v883
  %1045 = vmatprep.subr.bf16.mxu0 %v886
  %1046 = vmatpush1.bf16.msra.mxu0 %v885
  %1047 = vmatprep.subr.bf16.mxu0 %v888
  %1048 = vmatpush1.bf16.msra.mxu0 %v887
  %1049 = vmatprep.subr.bf16.mxu0 %v890
  %1050 = vmatpush1.bf16.msra.mxu0 %v889
  %1051 = vmatprep.subr.bf16.mxu0 %v892
  %1052 = vmatpush1.bf16.msra.mxu0 %v891
  %1053 = vmatprep.subr.bf16.mxu0 %v894
  %1054 = vmatpush1.bf16.msra.mxu0 %v893
  %1055 = vmatprep.subr.bf16.mxu0 %v896
  %1056 = vmatpush1.bf16.msra.mxu0 %v895
  %1057 = vmatprep.mubr.bf16.mxu0 %v536
  %1058 = vmatmul.mubr.bf16.gmra.mrb[0].mxu0 %v535
  %v1059 = vpop.f32.mrb[0].mxu0
  %v1060 = vadd.f32 0.0, %v1059
  %v1061 = vpop.f32.mrb[0].mxu0
  %v1062 = vadd.f32 0.0, %v1061
  %v1063 = vpop.f32.mrb[0].mxu0
  %v1064 = vadd.f32 0.0, %v1063
  %v1065 = vpop.f32.mrb[0].mxu0
  %v1066 = vadd.f32 0.0, %v1065
  %1067 = vmatprep.mubr.bf16.mxu0 %v540
  %1068 = vmatmul.mubr.bf16.gmra.mrb[0].mxu0 %v539
  %v1069 = vpop.f32.mrb[0].mxu0
  %v1070 = vadd.f32 0.0, %v1069
  %v1071 = vpop.f32.mrb[0].mxu0
  %v1072 = vadd.f32 0.0, %v1071
  %v1073 = vpop.f32.mrb[0].mxu0
  %v1074 = vadd.f32 0.0, %v1073
  %v1075 = vpop.f32.mrb[0].mxu0
  %v1076 = vadd.f32 0.0, %v1075
  %1077 = vmatprep.mubr.bf16.mxu0 %v537
  %1078 = vmatmul.mubr.bf16.gmra.mrb[0].mxu0 %v536
  %v1079 = vpop.f32.mrb[0].mxu0
  %v1080 = vadd.f32 0.0, %v1079
  %v1081 = vpop.f32.mrb[0].mxu0
  %v1082 = vadd.f32 0.0, %v1081
  %v1083 = vpop.f32.mrb[0].mxu0
  %v1084 = vadd.f32 0.0, %v1083
  %v1085 = vpop.f32.mrb[0].mxu0
  %v1086 = vadd.f32 0.0, %v1085
  %1087 = vmatprep.mubr.bf16.mxu0 %v541
  %1088 = vmatmul.mubr.bf16.gmra.mrb[0].mxu0 %v540
  %v1089 = vpop.f32.mrb[0].mxu0
  %v1090 = vadd.f32 0.0, %v1089
  %v1091 = vpop.f32.mrb[0].mxu0
  %v1092 = vadd.f32 0.0, %v1091
  %v1093 = vpop.f32.mrb[0].mxu0
  %v1094 = vadd.f32 0.0, %v1093
  %v1095 = vpop.f32.mrb[0].mxu0
  %v1096 = vadd.f32 0.0, %v1095
  %1097 = vdwg.mxu0
  %1098 = vmatprep.subr.bf16.mxu0 %v898
  %1099 = vmatpush1.bf16.msra.mxu0 %v897
  %1100 = vmatprep.subr.bf16.mxu0 %v900
  %1101 = vmatpush1.bf16.msra.mxu0 %v899
  %1102 = vmatprep.subr.bf16.mxu0 %v902
  %1103 = vmatpush1.bf16.msra.mxu0 %v901
  %1104 = vmatprep.subr.bf16.mxu0 %v904
  %1105 = vmatpush1.bf16.msra.mxu0 %v903
  %1106 = vmatprep.subr.bf16.mxu0 %v906
  %1107 = vmatpush1.bf16.msra.mxu0 %v905
  %1108 = vmatprep.subr.bf16.mxu0 %v908
  %1109 = vmatpush1.bf16.msra.mxu0 %v907
  %1110 = vmatprep.subr.bf16.mxu0 %v910
  %1111 = vmatpush1.bf16.msra.mxu0 %v909
  %1112 = vmatprep.subr.bf16.mxu0 %v912
  %1113 = vmatpush1.bf16.msra.mxu0 %v911
  %1114 = vmatprep.subr.bf16.mxu0 %v914
  %1115 = vmatpush1.bf16.msra.mxu0 %v913
  %1116 = vmatprep.subr.bf16.mxu0 %v916
  %1117 = vmatpush1.bf16.msra.mxu0 %v915
  %1118 = vmatprep.subr.bf16.mxu0 %v918
  %1119 = vmatpush1.bf16.msra.mxu0 %v917
  %1120 = vmatprep.subr.bf16.mxu0 %v920
  %1121 = vmatpush1.bf16.msra.mxu0 %v919
  %1122 = vmatprep.subr.bf16.mxu0 %v922
  %1123 = vmatpush1.bf16.msra.mxu0 %v921
  %1124 = vmatprep.subr.bf16.mxu0 %v924
  %1125 = vmatpush1.bf16.msra.mxu0 %v923
  %1126 = vmatprep.subr.bf16.mxu0 %v926
  %1127 = vmatpush1.bf16.msra.mxu0 %v925
  %1128 = vmatprep.subr.bf16.mxu0 %v928
  %1129 = vmatpush1.bf16.msra.mxu0 %v927
  %1130 = vmatprep.mubr.bf16.mxu0 %v538
  %1131 = vmatmul.mubr.bf16.gmra.mrb[0].mxu0 %v537
  %v1132 = vpop.f32.mrb[0].mxu0
  %v1133 = vadd.f32 %v1060, %v1132
  %v1134 = vpop.f32.mrb[0].mxu0
  %v1135 = vadd.f32 %v1062, %v1134
  %v1136 = vpop.f32.mrb[0].mxu0
  %v1137 = vadd.f32 %v1064, %v1136
  %v1138 = vpop.f32.mrb[0].mxu0
  %v1139 = vadd.f32 %v1066, %v1138
  %1140 = vmatprep.mubr.bf16.mxu0 %v542
  %1141 = vmatmul.mubr.bf16.gmra.mrb[0].mxu0 %v541
  %v1142 = vpop.f32.mrb[0].mxu0
  %v1143 = vadd.f32 %v1070, %v1142
  %v1144 = vpop.f32.mrb[0].mxu0
  %v1145 = vadd.f32 %v1072, %v1144
  %v1146 = vpop.f32.mrb[0].mxu0
  %v1147 = vadd.f32 %v1074, %v1146
  %v1148 = vpop.f32.mrb[0].mxu0
  %v1149 = vadd.f32 %v1076, %v1148
  %1150 = vmatprep.mubr.bf16.mxu0 %v539
  %1151 = vmatmul.mubr.bf16.gmra.mrb[0].mxu0 %v538
  %v1152 = vpop.f32.mrb[0].mxu0
  %v1153 = vadd.f32 %v1080, %v1152
  %v1154 = vpop.f32.mrb[0].mxu0
  %v1155 = vadd.f32 %v1082, %v1154
  %v1156 = vpop.f32.mrb[0].mxu0
  %v1157 = vadd.f32 %v1084, %v1156
  %v1158 = vpop.f32.mrb[0].mxu0
  %v1159 = vadd.f32 %v1086, %v1158
  %1160 = vmatprep.mubr.bf16.mxu0 %v543
  %1161 = vmatmul.mubr.bf16.gmra.mrb[0].mxu0 %v542
  %v1162 = vpop.f32.mrb[0].mxu0
  %v1163 = vadd.f32 %v1090, %v1162
  %v1164 = vpop.f32.mrb[0].mxu0
  %v1165 = vadd.f32 %v1092, %v1164
  %v1166 = vpop.f32.mrb[0].mxu0
  %v1167 = vadd.f32 %v1094, %v1166
  %v1168 = vpop.f32.mrb[0].mxu0
  %v1169 = vadd.f32 %v1096, %v1168
  %1170 = vdwg.mxu0
  %1171 = vmatprep.subr.bf16.mxu0 %v930
  %1172 = vmatpush1.bf16.msra.mxu0 %v929
  %1173 = vmatprep.subr.bf16.mxu0 %v932
  %1174 = vmatpush1.bf16.msra.mxu0 %v931
  %1175 = vmatprep.subr.bf16.mxu0 %v934
  %1176 = vmatpush1.bf16.msra.mxu0 %v933
  %1177 = vmatprep.subr.bf16.mxu0 %v936
  %1178 = vmatpush1.bf16.msra.mxu0 %v935
  %1179 = vmatprep.subr.bf16.mxu0 %v938
  %1180 = vmatpush1.bf16.msra.mxu0 %v937
  %1181 = vmatprep.subr.bf16.mxu0 %v940
  %1182 = vmatpush1.bf16.msra.mxu0 %v939
  %1183 = vmatprep.subr.bf16.mxu0 %v942
  %1184 = vmatpush1.bf16.msra.mxu0 %v941
  %1185 = vmatprep.subr.bf16.mxu0 %v944
  %1186 = vmatpush1.bf16.msra.mxu0 %v943
  %1187 = vmatprep.subr.bf16.mxu0 0
  %1188 = vmatpush1.bf16.msra.mxu0 0
  %1189 = vmatprep.subr.bf16.mxu0 0
  %1190 = vmatpush1.bf16.msra.mxu0 0
  %1191 = vmatprep.subr.bf16.mxu0 0
  %1192 = vmatpush1.bf16.msra.mxu0 0
  %1193 = vmatprep.subr.bf16.mxu0 0
  %1194 = vmatpush1.bf16.msra.mxu0 0
  %1195 = vmatprep.subr.bf16.mxu0 0
  %1196 = vmatpush1.bf16.msra.mxu0 0
  %1197 = vmatprep.subr.bf16.mxu0 0
  %1198 = vmatpush1.bf16.msra.mxu0 0
  %1199 = vmatprep.subr.bf16.mxu0 0
  %1200 = vmatpush1.bf16.msra.mxu0 0
  %1201 = vmatprep.subr.bf16.mxu0 0
  %1202 = vmatpush1.bf16.msra.mxu0 0
  %1203 = vmatprep.mubr.bf16.mxu0 0
  %1204 = vmatmul.mubr.bf16.gmra.mrb[0].mxu0 %v539
  %v1205 = vpop.f32.mrb[0].mxu0
  %v1206 = vadd.f32 %v1133, %v1205
  %v1207 = vpop.f32.mrb[0].mxu0
  %v1208 = vadd.f32 %v1135, %v1207
  %v1209 = vpop.f32.mrb[0].mxu0
  %v1210 = vadd.f32 %v1137, %v1209
  %v1211 = vpop.f32.mrb[0].mxu0
  %v1212 = vadd.f32 %v1139, %v1211
  %1213 = vmatprep.mubr.bf16.mxu0 0
  %1214 = vmatmul.mubr.bf16.gmra.mrb[0].mxu0 %v543
  %v1215 = vpop.f32.mrb[0].mxu0
  %v1216 = vadd.f32 %v1143, %v1215
  %v1217 = vpop.f32.mrb[0].mxu0
  %v1218 = vadd.f32 %v1145, %v1217
  %v1219 = vpop.f32.mrb[0].mxu0
  %v1220 = vadd.f32 %v1147, %v1219
  %v1221 = vpop.f32.mrb[0].mxu0
  %v1222 = vadd.f32 %v1149, %v1221
  %1223 = vmatprep.mubr.bf16.mxu0 0
  %1224 = vmatmul.mubr.bf16.gmra.mrb[0].mxu0 %v540
  %v1225 = vpop.f32.mrb[0].mxu0
  %v1226 = vadd.f32 %v1153, %v1225
  %v1227 = vpop.f32.mrb[0].mxu0
  %v1228 = vadd.f32 %v1155, %v1227
  %v1229 = vpop.f32.mrb[0].mxu0
  %v1230 = vadd.f32 %v1157, %v1229
  %v1231 = vpop.f32.mrb[0].mxu0
  %v1232 = vadd.f32 %v1159, %v1231
  %1233 = vmatprep.mubr.bf16.mxu0 0
  %1234 = vmatmul.mubr.bf16.gmra.mrb[0].mxu0 %v544
  %v1235 = vpop.f32.mrb[0].mxu0
  %v1236 = vadd.f32 %v1163, %v1235
  %v1237 = vpop.f32.mrb[0].mxu0
  %v1238 = vadd.f32 %v1165, %v1237
  %v1239 = vpop.f32.mrb[0].mxu0
  %v1240 = vadd.f32 %v1167, %v1239
  %v1241 = vpop.f32.mrb[0].mxu0
  %v1242 = vadd.f32 %v1169, %v1241
  %1243 = vdwg.mxu0
  %v1244 = vmax.f32 %v1206, %v1226
  %v1245 = vmax.f32 %v1208, %v1228
  %v1246 = vmax.f32 %v1210, %v1230
  %v1247 = vmax.f32 %v1212, %v1232
  %v1248 = vmax.f32 %v1216, %v1236
  %v1249 = vmax.f32 %v1218, %v1238
  %v1250 = vmax.f32 %v1220, %v1240
  %v1251 = vmax.f32 %v1222, %v1242
  %v1252 = vmax.f32 %v1244, %v1245
  %v1253 = vmax.f32 %v1246, %v1247
  %v1254 = vmax.f32 %v1248, %v1249
  %v1255 = vmax.f32 %v1250, %v1251
  %v1256 = vld [vmem:[%s4] sm:$0x1]
  %v1258 = vlaneseq
  %v1259 = vshrl.u32 %v1258, 7
  %v1260 = vsub.s32 0, %v1259
  %v1261 = vrot.slane %v1256, %v1260
  %v1263 = vadd.f32 %v1252, %v1261
  %v1264 = vadd.f32 %v1253, %v1261
  %v1265 = vadd.f32 %v1254, %v1261
  %v1266 = vadd.f32 %v1255, %v1261
  %v1267 = vmax.f32 %v1263, 0.0
  %v1268 = vmax.f32 %v1264, 0.0
  %v1269 = vmax.f32 %v1265, 0.0
  %v1270 = vmax.f32 %v1266, 0.0
  %v1271 = vpack.c.bf16 %v1267, %v1267
  %v1272 = vpack.c.bf16 %v1268, %v1268
  %v1273 = vpack.c.bf16 %v1269, %v1269
  %v1274 = vpack.c.bf16 %v1270, %v1270
  %v1275 = vld [vmem:[%s5] sm:$0xf]
  %v1276 = vld [vmem:[%s5 + $0x4] sm:$0xf]
  %v1277 = vld [vmem:[%s5 + $0x8] sm:$0xf]
  %v1278 = vld [vmem:[%s5 + $0xc] sm:$0xf]
  %v1279 = vld [vmem:[%s5 + $0x10] sm:$0xf]
  %v1280 = vld [vmem:[%s5 + $0x14] sm:$0xf]
  %v1281 = vld [vmem:[%s5 + $0x18] sm:$0xf]
  %v1282 = vld [vmem:[%s5 + $0x1c] sm:$0xf]
  %v1283 = vld [vmem:[%s5 + $0x20] sm:$0xf]
  %v1284 = vld [vmem:[%s5 + $0x24] sm:$0xf]
  %v1285 = vld [vmem:[%s5 + $0x28] sm:$0xf]
  %v1286 = vld [vmem:[%s5 + $0x2c] sm:$0xf]
  %v1287 = vld [vmem:[%s5 + $0x30] sm:$0xf]
  %v1288 = vld [vmem:[%s5 + $0x34] sm:$0xf]
  %v1289 = vld [vmem:[%s5 + $0x38] sm:$0xf]
  %v1290 = vld [vmem:[%s5 + $0x3c] sm:$0xf]
  %v1291 = vld [vmem:[%s5 + $0x40] sm:$0xf]
  %v1292 = vld [vmem:[%s5 + $0x44] sm:$0xf]
  %v1293 = vld [vmem:[%s5 + $0x48] sm:$0xf]
  %v1294 = vld [vmem:[%s5 + $0x4c] sm:$0xf]
  %v1295 = vld [vmem:[%s5 + $0x50] sm:$0xf]
  %v1296 = vld [vmem:[%s5 + $0x54] sm:$0xf]
  %v1297 = vld [vmem:[%s5 + $0x58] sm:$0xf]
  %v1298 = vld [vmem:[%s5 + $0x5c] sm:$0xf]
  %v1299 = vld [vmem:[%s5 + $0x60] sm:$0xf]
  %v1300 = vld [vmem:[%s5 + $0x64] sm:$0xf]
  %v1301 = vld [vmem:[%s5 + $0x68] sm:$0xf]
  %v1302 = vld [vmem:[%s5 + $0x6c] sm:$0xf]
  %v1303 = vld [vmem:[%s5 + $0x70] sm:$0xf]
  %v1304 = vld [vmem:[%s5 + $0x74] sm:$0xf]
  %v1305 = vld [vmem:[%s5 + $0x78] sm:$0xf]
  %v1306 = vld [vmem:[%s5 + $0x7c] sm:$0xf]
  %v1307 = vld [vmem:[%s5 + $0x80] sm:$0xf]
  %v1308 = vld [vmem:[%s5 + $0x84] sm:$0xf]
  %v1309 = vld [vmem:[%s5 + $0x88] sm:$0xf]
  %v1310 = vld [vmem:[%s5 + $0x8c] sm:$0xf]
  %v1311 = vld [vmem:[%s5 + $0x90] sm:$0xf]
  %v1312 = vld [vmem:[%s5 + $0x94] sm:$0xf]
  %v1313 = vld [vmem:[%s5 + $0x98] sm:$0xf]
  %v1314 = vld [vmem:[%s5 + $0x9c] sm:$0xf]
  %v1315 = vld [vmem:[%s5 + $0xa0] sm:$0xf]
  %v1316 = vld [vmem:[%s5 + $0xa4] sm:$0xf]
  %v1317 = vld [vmem:[%s5 + $0xa8] sm:$0xf]
  %v1318 = vld [vmem:[%s5 + $0xac] sm:$0xf]
  %v1319 = vld [vmem:[%s5 + $0xb0] sm:$0xf]
  %v1320 = vld [vmem:[%s5 + $0xb4] sm:$0xf]
  %v1321 = vld [vmem:[%s5 + $0xb8] sm:$0xf]
  %v1322 = vld [vmem:[%s5 + $0xbc] sm:$0xf]
  %v1323 = vld [vmem:[%s5 + $0xc0] sm:$0xf]
  %v1324 = vld [vmem:[%s5 + $0xc4] sm:$0xf]
  %v1325 = vld [vmem:[%s5 + $0xc8] sm:$0xf]
  %v1326 = vld [vmem:[%s5 + $0xcc] sm:$0xf]
  %v1327 = vld [vmem:[%s5 + $0xd0] sm:$0xf]
  %v1328 = vld [vmem:[%s5 + $0xd4] sm:$0xf]
  %v1329 = vld [vmem:[%s5 + $0xd8] sm:$0xf]
  %v1330 = vld [vmem:[%s5 + $0xdc] sm:$0xf]
  %v1331 = vld [vmem:[%s5 + $0xe0] sm:$0xf]
  %v1332 = vld [vmem:[%s5 + $0xe4] sm:$0xf]
  %v1333 = vld [vmem:[%s5 + $0xe8] sm:$0xf]
  %v1334 = vld [vmem:[%s5 + $0xec] sm:$0xf]
  %v1335 = vld [vmem:[%s5 + $0xf0] sm:$0xf]
  %v1336 = vld [vmem:[%s5 + $0xf4] sm:$0xf]
  %v1337 = vld [vmem:[%s5 + $0xf8] sm:$0xf]
  %v1338 = vld [vmem:[%s5 + $0xfc] sm:$0xf]
  %v1339 = vld [vmem:[%s6] sm:$0x1]
  %v1341 = vlaneseq
  %v1342 = vshrl.u32 %v1341, 7
  %v1343 = vsub.s32 0, %v1342
  %v1344 = vrot.slane %v1339, %v1343
  %v1410 = vunpack.c.l.b16 %v1275
  %v1411 = vunpack.c.l.b16 %v1276
  %v1412 = vunpack.c.l.b16 %v1277
  %v1413 = vunpack.c.l.b16 %v1278
  %v1414 = vunpack.c.l.b16 %v1279
  %v1415 = vunpack.c.l.b16 %v1280
  %v1416 = vunpack.c.l.b16 %v1281
  %v1417 = vunpack.c.l.b16 %v1282
  %v1418 = vunpack.c.l.b16 %v1283
  %v1419 = vunpack.c.l.b16 %v1284
  %v1420 = vunpack.c.l.b16 %v1285
  %v1421 = vunpack.c.l.b16 %v1286
  %v1422 = vunpack.c.l.b16 %v1287
  %v1423 = vunpack.c.l.b16 %v1288
  %v1424 = vunpack.c.l.b16 %v1289
  %v1425 = vunpack.c.l.b16 %v1290
  %v1426 = vunpack.c.l.b16 %v1291
  %v1427 = vunpack.c.l.b16 %v1292
  %v1428 = vunpack.c.l.b16 %v1293
  %v1429 = vunpack.c.l.b16 %v1294
  %v1430 = vunpack.c.l.b16 %v1295
  %v1431 = vunpack.c.l.b16 %v1296
  %v1432 = vunpack.c.l.b16 %v1297
  %v1433 = vunpack.c.l.b16 %v1298
  %v1434 = vunpack.c.l.b16 %v1299
  %v1435 = vunpack.c.l.b16 %v1300
  %v1436 = vunpack.c.l.b16 %v1301
  %v1437 = vunpack.c.l.b16 %v1302
  %v1438 = vunpack.c.l.b16 %v1303
  %v1439 = vunpack.c.l.b16 %v1304
  %v1440 = vunpack.c.l.b16 %v1305
  %v1441 = vunpack.c.l.b16 %v1306
  %v1442 = vunpack.c.l.b16 %v1307
  %v1443 = vunpack.c.l.b16 %v1308
  %v1444 = vunpack.c.l.b16 %v1309
  %v1445 = vunpack.c.l.b16 %v1310
  %v1446 = vunpack.c.l.b16 %v1311
  %v1447 = vunpack.c.l.b16 %v1312
  %v1448 = vunpack.c.l.b16 %v1313
  %v1449 = vunpack.c.l.b16 %v1314
  %v1450 = vunpack.c.l.b16 %v1315
  %v1451 = vunpack.c.l.b16 %v1316
  %v1452 = vunpack.c.l.b16 %v1317
  %v1453 = vunpack.c.l.b16 %v1318
  %v1454 = vunpack.c.l.b16 %v1319
  %v1455 = vunpack.c.l.b16 %v1320
  %v1456 = vunpack.c.l.b16 %v1321
  %v1457 = vunpack.c.l.b16 %v1322
  %v1458 = vunpack.c.l.b16 %v1323
  %v1459 = vunpack.c.l.b16 %v1324
  %v1460 = vunpack.c.l.b16 %v1325
  %v1461 = vunpack.c.l.b16 %v1326
  %v1462 = vunpack.c.l.b16 %v1327
  %v1463 = vunpack.c.l.b16 %v1328
  %v1464 = vunpack.c.l.b16 %v1329
  %v1465 = vunpack.c.l.b16 %v1330
  %v1466 = vunpack.c.l.b16 %v1331
  %v1467 = vunpack.c.l.b16 %v1332
  %v1468 = vunpack.c.l.b16 %v1333
  %v1469 = vunpack.c.l.b16 %v1334
  %v1470 = vunpack.c.l.b16 %v1335
  %v1471 = vunpack.c.l.b16 %v1336
  %v1472 = vunpack.c.l.b16 %v1337
  %v1473 = vunpack.c.l.b16 %v1338
  %v1474 = vpack.c.b16 %v1411, %v1410
  %v1475 = vpack.c.b16 %v1413, %v1412
  %v1476 = vpack.c.b16 %v1415, %v1414
  %v1477 = vpack.c.b16 %v1417, %v1416
  %v1478 = vpack.c.b16 %v1419, %v1418
  %v1479 = vpack.c.b16 %v1421, %v1420
  %v1480 = vpack.c.b16 %v1423, %v1422
  %v1481 = vpack.c.b16 %v1425, %v1424
  %v1482 = vpack.c.b16 %v1427, %v1426
  %v1483 = vpack.c.b16 %v1429, %v1428
  %v1484 = vpack.c.b16 %v1431, %v1430
  %v1485 = vpack.c.b16 %v1433, %v1432
  %v1486 = vpack.c.b16 %v1435, %v1434
  %v1487 = vpack.c.b16 %v1437, %v1436
  %v1488 = vpack.c.b16 %v1439, %v1438
  %v1489 = vpack.c.b16 %v1441, %v1440
  %v1490 = vpack.c.b16 %v1443, %v1442
  %v1491 = vpack.c.b16 %v1445, %v1444
  %v1492 = vpack.c.b16 %v1447, %v1446
  %v1493 = vpack.c.b16 %v1449, %v1448
  %v1494 = vpack.c.b16 %v1451, %v1450
  %v1495 = vpack.c.b16 %v1453, %v1452
  %v1496 = vpack.c.b16 %v1455, %v1454
  %v1497 = vpack.c.b16 %v1457, %v1456
  %v1498 = vpack.c.b16 %v1459, %v1458
  %v1499 = vpack.c.b16 %v1461, %v1460
  %v1500 = vpack.c.b16 %v1463, %v1462
  %v1501 = vpack.c.b16 %v1465, %v1464
  %v1502 = vpack.c.b16 %v1467, %v1466
  %v1503 = vpack.c.b16 %v1469, %v1468
  %v1504 = vpack.c.b16 %v1471, %v1470
  %v1505 = vpack.c.b16 %v1473, %v1472
  %1538 = vmatprep.subr.bf16.mxu0 0
  %1539 = vmatpush1.bf16.msra.mxu0 %v1474
  %1540 = vmatprep.subr.bf16.mxu0 0
  %1541 = vmatpush1.bf16.msra.mxu0 %v1475
  %1542 = vmatprep.subr.bf16.mxu0 0
  %1543 = vmatpush1.bf16.msra.mxu0 %v1476
  %1544 = vmatprep.subr.bf16.mxu0 0
  %1545 = vmatpush1.bf16.msra.mxu0 %v1477
  %1546 = vmatprep.subr.bf16.mxu0 0
  %1547 = vmatpush1.bf16.msra.mxu0 %v1478
  %1548 = vmatprep.subr.bf16.mxu0 0
  %1549 = vmatpush1.bf16.msra.mxu0 %v1479
  %1550 = vmatprep.subr.bf16.mxu0 0
  %1551 = vmatpush1.bf16.msra.mxu0 %v1480
  %1552 = vmatprep.subr.bf16.mxu0 0
  %1553 = vmatpush1.bf16.msra.mxu0 %v1481
  %1554 = vmatprep.subr.bf16.mxu0 0
  %1555 = vmatpush1.bf16.msra.mxu0 %v1482
  %1556 = vmatprep.subr.bf16.mxu0 0
  %1557 = vmatpush1.bf16.msra.mxu0 %v1483
  %1558 = vmatprep.subr.bf16.mxu0 0
  %1559 = vmatpush1.bf16.msra.mxu0 %v1484
  %1560 = vmatprep.subr.bf16.mxu0 0
  %1561 = vmatpush1.bf16.msra.mxu0 %v1485
  %1562 = vmatprep.subr.bf16.mxu0 0
  %1563 = vmatpush1.bf16.msra.mxu0 %v1486
  %1564 = vmatprep.subr.bf16.mxu0 0
  %1565 = vmatpush1.bf16.msra.mxu0 %v1487
  %1566 = vmatprep.subr.bf16.mxu0 0
  %1567 = vmatpush1.bf16.msra.mxu0 %v1488
  %1568 = vmatprep.subr.bf16.mxu0 0
  %1569 = vmatpush1.bf16.msra.mxu0 %v1489
  %1570 = vmatprep.mubr.bf16.mxu0 %v1272
  %1571 = vmatmul.mubr.bf16.gmra.mrb[0].mxu0 %v1271
  %v1572 = vpop.f32.mrb[0].mxu0
  %v1573 = vadd.f32 %v1344, %v1572
  %v1574 = vpop.f32.mrb[0].mxu0
  %v1575 = vpop.f32.mrb[0].mxu0
  %v1576 = vpop.f32.mrb[0].mxu0
  %1577 = vdwg.mxu0
  %1578 = vmatprep.subr.bf16.mxu0 0
  %1579 = vmatpush1.bf16.msra.mxu0 %v1490
  %1580 = vmatprep.subr.bf16.mxu0 0
  %1581 = vmatpush1.bf16.msra.mxu0 %v1491
  %1582 = vmatprep.subr.bf16.mxu0 0
  %1583 = vmatpush1.bf16.msra.mxu0 %v1492
  %1584 = vmatprep.subr.bf16.mxu0 0
  %1585 = vmatpush1.bf16.msra.mxu0 %v1493
  %1586 = vmatprep.subr.bf16.mxu0 0
  %1587 = vmatpush1.bf16.msra.mxu0 %v1494
  %1588 = vmatprep.subr.bf16.mxu0 0
  %1589 = vmatpush1.bf16.msra.mxu0 %v1495
  %1590 = vmatprep.subr.bf16.mxu0 0
  %1591 = vmatpush1.bf16.msra.mxu0 %v1496
  %1592 = vmatprep.subr.bf16.mxu0 0
  %1593 = vmatpush1.bf16.msra.mxu0 %v1497
  %1594 = vmatprep.subr.bf16.mxu0 0
  %1595 = vmatpush1.bf16.msra.mxu0 %v1498
  %1596 = vmatprep.subr.bf16.mxu0 0
  %1597 = vmatpush1.bf16.msra.mxu0 %v1499
  %1598 = vmatprep.subr.bf16.mxu0 0
  %1599 = vmatpush1.bf16.msra.mxu0 %v1500
  %1600 = vmatprep.subr.bf16.mxu0 0
  %1601 = vmatpush1.bf16.msra.mxu0 %v1501
  %1602 = vmatprep.subr.bf16.mxu0 0
  %1603 = vmatpush1.bf16.msra.mxu0 %v1502
  %1604 = vmatprep.subr.bf16.mxu0 0
  %1605 = vmatpush1.bf16.msra.mxu0 %v1503
  %1606 = vmatprep.subr.bf16.mxu0 0
  %1607 = vmatpush1.bf16.msra.mxu0 %v1504
  %1608 = vmatprep.subr.bf16.mxu0 0
  %1609 = vmatpush1.bf16.msra.mxu0 %v1505
  %1610 = vmatprep.mubr.bf16.mxu0 %v1274
  %1611 = vmatmul.mubr.bf16.gmra.mrb[0].mxu0 %v1273
  %v1612 = vpop.f32.mrb[0].mxu0
  %v1613 = vadd.f32 %v1573, %v1612
  %v1614 = vpop.f32.mrb[0].mxu0
  %v1615 = vpop.f32.mrb[0].mxu0
  %v1616 = vpop.f32.mrb[0].mxu0
  %1617 = vdwg.mxu0
  %v1618 = vmax.f32 %v1613, 0.0
  %v1619 = vpack.c.bf16 %v1618, %v1618
  %v1620 = vld [vmem:[%s7] sm:$0xf]
  %v1621 = vld [vmem:[%s7 + $0x4] sm:$0xf]
  %v1622 = vld [vmem:[%s7 + $0x8] sm:$0xf]
  %v1623 = vld [vmem:[%s7 + $0xc] sm:$0xf]
  %v1624 = vld [vmem:[%s7 + $0x10] sm:$0xf]
  %v1625 = vld [vmem:[%s7 + $0x14] sm:$0xf]
  %v1626 = vld [vmem:[%s7 + $0x18] sm:$0xf]
  %v1627 = vld [vmem:[%s7 + $0x1c] sm:$0xf]
  %v1628 = vld [vmem:[%s7 + $0x20] sm:$0xf]
  %v1629 = vld [vmem:[%s7 + $0x24] sm:$0xf]
  %v1630 = vld [vmem:[%s7 + $0x28] sm:$0xf]
  %v1631 = vld [vmem:[%s7 + $0x2c] sm:$0xf]
  %v1632 = vld [vmem:[%s7 + $0x30] sm:$0xf]
  %v1633 = vld [vmem:[%s7 + $0x34] sm:$0xf]
  %v1634 = vld [vmem:[%s7 + $0x38] sm:$0xf]
  %v1635 = vld [vmem:[%s7 + $0x3c] sm:$0xf]
  %v1636 = vld [vmem:[%s8] sm:$0x1]
  %v1638 = vlaneseq
  %v1639 = vshrl.u32 %v1638, 7
  %v1640 = vsub.s32 0, %v1639
  %v1641 = vrot.slane %v1636, %v1640
  %v1659 = vunpack.c.l.b16 %v1620
  %v1660 = vunpack.c.l.b16 %v1621
  %v1661 = vunpack.c.l.b16 %v1622
  %v1662 = vunpack.c.l.b16 %v1623
  %v1663 = vunpack.c.l.b16 %v1624
  %v1664 = vunpack.c.l.b16 %v1625
  %v1665 = vunpack.c.l.b16 %v1626
  %v1666 = vunpack.c.l.b16 %v1627
  %v1667 = vunpack.c.l.b16 %v1628
  %v1668 = vunpack.c.l.b16 %v1629
  %v1669 = vunpack.c.l.b16 %v1630
  %v1670 = vunpack.c.l.b16 %v1631
  %v1671 = vunpack.c.l.b16 %v1632
  %v1672 = vunpack.c.l.b16 %v1633
  %v1673 = vunpack.c.l.b16 %v1634
  %v1674 = vunpack.c.l.b16 %v1635
  %v1675 = vpack.c.b16 %v1660, %v1659
  %v1676 = vpack.c.b16 %v1662, %v1661
  %v1677 = vpack.c.b16 %v1664, %v1663
  %v1678 = vpack.c.b16 %v1666, %v1665
  %v1679 = vpack.c.b16 %v1668, %v1667
  %v1680 = vpack.c.b16 %v1670, %v1669
  %v1681 = vpack.c.b16 %v1672, %v1671
  %v1682 = vpack.c.b16 %v1674, %v1673
  %1691 = vmatprep.subr.bf16.mxu0 0
  %1692 = vmatpush1.bf16.msra.mxu0 %v1675
  %1693 = vmatprep.subr.bf16.mxu0 0
  %1694 = vmatpush1.bf16.msra.mxu0 %v1676
  %1695 = vmatprep.subr.bf16.mxu0 0
  %1696 = vmatpush1.bf16.msra.mxu0 %v1677
  %1697 = vmatprep.subr.bf16.mxu0 0
  %1698 = vmatpush1.bf16.msra.mxu0 %v1678
  %1699 = vmatprep.subr.bf16.mxu0 0
  %1700 = vmatpush1.bf16.msra.mxu0 %v1679
  %1701 = vmatprep.subr.bf16.mxu0 0
  %1702 = vmatpush1.bf16.msra.mxu0 %v1680
  %1703 = vmatprep.subr.bf16.mxu0 0
  %1704 = vmatpush1.bf16.msra.mxu0 %v1681
  %1705 = vmatprep.subr.bf16.mxu0 0
  %1706 = vmatpush1.bf16.msra.mxu0 %v1682
  %1707 = vmatprep.subr.bf16.mxu0 0
  %1708 = vmatpush1.bf16.msra.mxu0 0
  %1709 = vmatprep.subr.bf16.mxu0 0
  %1710 = vmatpush1.bf16.msra.mxu0 0
  %1711 = vmatprep.subr.bf16.mxu0 0
  %1712 = vmatpush1.bf16.msra.mxu0 0
  %1713 = vmatprep.subr.bf16.mxu0 0
  %1714 = vmatpush1.bf16.msra.mxu0 0
  %1715 = vmatprep.subr.bf16.mxu0 0
  %1716 = vmatpush1.bf16.msra.mxu0 0
  %1717 = vmatprep.subr.bf16.mxu0 0
  %1718 = vmatpush1.bf16.msra.mxu0 0
  %1719 = vmatprep.subr.bf16.mxu0 0
  %1720 = vmatpush1.bf16.msra.mxu0 0
  %1721 = vmatprep.subr.bf16.mxu0 0
  %1722 = vmatpush1.bf16.msra.mxu0 0
  %1723 = vmatprep.mubr.bf16.mxu0 0
  %1724 = vmatmul.mubr.bf16.gmra.mrb[0].mxu0 %v1619
  %v1725 = vpop.f32.mrb[0].mxu0
  %v1726 = vadd.f32 %v1641, %v1725
  %v1727 = vpop.f32.mrb[0].mxu0
  %v1728 = vpop.f32.mrb[0].mxu0
  %v1729 = vpop.f32.mrb[0].mxu0
  %1730 = vdwg.mxu0
  %1731 = vst [vmem:[%s9] sm:$0xff] %v1726
  // Predicated region
  $region38: #{cnn_mnist_forward.1} parent=0 // pred_check
    _
  $region39: #{cnn_mnist_forward.1} parent=0 // pred_check_branch
    %1733 = sbr.rel (0) target = $region41
  $region40: #{cnn_mnist_forward.1} parent=0 // pred_region
    _
  $region41: #{cnn_mnist_forward.1} parent=0 // pred_fallthru
    _
  // Predicated region
  $region42: #{cnn_mnist_forward.1} parent=0 // pred_check
    _
  $region43: #{cnn_mnist_forward.1} parent=0 // pred_check_branch
    %1735 = sbr.rel (0) target = $region45
  $region44: #{cnn_mnist_forward.1} parent=0 // pred_region
    _
  $region45: #{cnn_mnist_forward.1} parent=0 // pred_fallthru
    _

</llo_original>
